<compile_context>
chip_gen: v7x
topology: tpu7x:2x2x1
jax: 0.10.0
libtpu: 0.0.40
codegen_flags: <defaults>
</compile_context>

<pallas_src>
import jax
import jax.numpy as jnp
from jax.experimental import pallas as pl
from jax.experimental.pallas import tpu as pltpu


def _spatial_distmult_kernel(
    zh_ref, zt_ref, ph_ref, pt_ref,            # edge-tiled, feature-major: (C,T)bf16 x2, (3,T)f32 x2
    rel_ref,                                   # (C,1) relation embedding
    lw1_ref, lb1_ref, lw2_ref, lb2_ref,        # link_lin MLP [4,16,32,16,1] (PyTorch (out,in))
    lw3_ref, lb3_ref, lw4_ref, lb4_ref,
    w1a_ref, w1b_ref, b1_ref, w2_ref, b2_ref,  # lin MLP [C+1, C, O], first layer split
    o_ref,                                     # (O, T) output tile (lane-dense)
):
    f32 = jnp.float32

    # ---- spatial link features (features on sublanes, edges on lanes) ----
    d = pt_ref[...] - ph_ref[...]                              # (3, T) f32
    d2 = d * d
    dist = jnp.sqrt(d2[0:1, :] + d2[1:2, :] + d2[2:3, :])      # (1, T)
    inv_d = pl.reciprocal(dist + 1e-8, approx=True)            # EUP slot (free-ish)
    dir_n = d * inv_d                                          # (3, T)

    # ---- link_lin: Linear(4,16) -> ReLU -> Linear(16,32) -> ReLU
    #                -> Linear(32,16) -> ReLU -> Linear(16,1) ----
    # First layer done as 4 outer-product MADs (K=4 is too small for the MXU and this
    # also avoids building the 4-wide link_feat concat). 1/max_distance is already
    # folded into lw1[:, 0] by the wrapper, so the raw `dist` is used directly.
    lw1 = lw1_ref[...]                                         # (16, 4)
    h = (lb1_ref[...]
         + lw1[:, 0:1] * dist
         + lw1[:, 1:2] * dir_n[0:1, :]
         + lw1[:, 2:3] * dir_n[1:2, :]
         + lw1[:, 3:4] * dir_n[2:3, :])                        # (16, T)
    h = jnp.maximum(h, 0.0)
    h = jnp.dot(lw2_ref[...], h, preferred_element_type=f32) + lb2_ref[...]   # (32, T)
    h = jnp.maximum(h, 0.0)
    h = jnp.dot(lw3_ref[...], h, preferred_element_type=f32) + lb3_ref[...]   # (16, T)
    h = jnp.maximum(h, 0.0)
    link_emb = jnp.dot(lw4_ref[...], h, preferred_element_type=f32) + lb4_ref[...]  # (1, T)

    # ---- DistMult trilinear term (upcast once: bf16 is storage-only, math in f32) ----
    zh = zh_ref[...].astype(f32)                               # (C, T)
    zt = zt_ref[...].astype(f32)
    drm = zh * rel_ref[...] * zt                               # (C, T)

    # ---- lin: Linear(C+1, C) -> ReLU -> Linear(C, O) ----
    # cat([drm, link_emb], -1) @ W1.T  ==  W1[:, :C] @ drm + W1[:, C:] (x) link_emb
    g = (jnp.dot(w1a_ref[...], drm, preferred_element_type=f32)
         + w1b_ref[...] * link_emb
         + b1_ref[...])                                        # (C, T)
    g = jnp.maximum(g, 0.0)
    out = jnp.dot(w2_ref[...], g, preferred_element_type=f32) + b2_ref[...]   # (O, T)
    o_ref[...] = out.astype(o_ref.dtype)


def spatial_distmult_decoder_forward(
    z, pos, edge_label_index, rel,
    lw1, lb1, lw2, lb2, lw3, lb3, lw4, lb4,
    w1, b1, w2, b2,
    *, tile_e=2048):
    """Pallas implementation of SpatialDistMultDecoder.forward.

    z    : (N, C)  node embeddings            pos : (N, 3)  node positions
    edge_label_index : (2, E) int32           rel : (C,)    rel_emb.weight[0]
    lw*/lb* : link_lin MLP([4,16,32,16,1]) params, PyTorch (out,in)/(out,) layout
    w1, b1  : (C, C+1), (C,)   first `lin` layer     w2, b2 : (O, C), (O,)  second layer
    returns : (E, O) float32
    """
    N, C = z.shape
    E = edge_label_index.shape[1]
    O = w2.shape[0]
    assert tile_e % 128 == 0, "tile_e must be a multiple of the 128-lane width"

    # --- global distance normaliser (tiny reduction over the node table) ---
    min_xyz = jnp.min(pos.astype(jnp.float32), axis=0)
    max_xyz = jnp.max(pos.astype(jnp.float32), axis=0)
    inv_maxd = 1.0 / jnp.sqrt(jnp.sum((max_xyz - min_xyz) ** 2))   # scalar

    # --- edge tiling with remainder handling (pad indices, slice output) ---
    num_tiles = pl.cdiv(E, tile_e)
    target_tiles = 4                      # >= 2 grid steps per v7x TensorCore
    if num_tiles < target_tiles and E > 128:
        tile_e = max(128, (E // target_tiles) // 128 * 128)
        num_tiles = pl.cdiv(E, tile_e)
    E_pad = num_tiles * tile_e
    pad = E_pad - E
    src = jnp.pad(edge_label_index[0], (0, pad))
    dst = jnp.pad(edge_label_index[1], (0, pad))

    # --- gathers: row-contiguous z[src] (whole C-wide rows), cast + transpose fused
    #     into the producer. zh/zt travel to the kernel as bf16 (dominant stream
    #     halved); positions stay f32 to avoid cancellation in the distance. ---
    zh_t = z[src].astype(jnp.bfloat16).T                # (C, E_pad) bf16
    zt_t = z[dst].astype(jnp.bfloat16).T                # (C, E_pad) bf16
    ph_t = pos[src].astype(jnp.float32).T               # (3, E_pad) f32
    pt_t = pos[dst].astype(jnp.float32).T               # (3, E_pad) f32

    # --- parameters in column / (out,in) layout, first lin layer split ---
    rel_c = rel.reshape(C, 1).astype(jnp.float32)
    # fold 1/max_distance into the distance column of the first link_lin layer
    col_scale = jnp.concatenate([inv_maxd.reshape(1), jnp.ones((3,), jnp.float32)])
    lw1f = lw1.astype(jnp.float32) * col_scale[None, :]          # (16, 4)
    w1a = w1[:, :C].astype(jnp.float32)                          # (C, C)
    w1b = w1[:, C:C + 1].astype(jnp.float32)                     # (C, 1)
    b1c = b1.reshape(C, 1).astype(jnp.float32)
    b2c = b2.reshape(O, 1).astype(jnp.float32)
    lb1c = lb1.reshape(-1, 1).astype(jnp.float32)
    lb2c = lb2.reshape(-1, 1).astype(jnp.float32)
    lb3c = lb3.reshape(-1, 1).astype(jnp.float32)
    lb4c = lb4.reshape(-1, 1).astype(jnp.float32)

    edge_inputs = (zh_t, zt_t, ph_t, pt_t)
    param_inputs = (rel_c,
                    lw1f, lb1c, lw2.astype(jnp.float32), lb2c,
                    lw3.astype(jnp.float32), lb3c, lw4.astype(jnp.float32), lb4c,
                    w1a, w1b, b1c, w2.astype(jnp.float32), b2c)

    in_specs = (
        [pl.BlockSpec((a.shape[0], tile_e), lambda i: (0, i)) for a in edge_inputs]
        + [pl.BlockSpec(a.shape, lambda i: (0, 0)) for a in param_inputs]   # resident
    )

    # --- advisory cost estimate for the XLA scheduler ---
    param_bytes = sum(int(a.size) * a.dtype.itemsize for a in param_inputs)
    link_flops = 2 * (4 * 16 + 16 * 32 + 32 * 16 + 16 * 1)
    lin_flops = 2 * (C * (C + 1) + C * O)
    edge_bytes = 2 * C * 2 + 6 * 4 + O * 4       # bf16 zh/zt + f32 pos + f32 out
    cost = pl.CostEstimate(
        flops=int(E_pad) * (link_flops + lin_flops + 4 * C + 16),
        transcendentals=2 * int(E_pad),
        bytes_accessed=int(E_pad) * edge_bytes + param_bytes,
    )

    out_t = pl.pallas_call(
        _spatial_distmult_kernel,
        out_shape=jax.ShapeDtypeStruct((O, E_pad), jnp.float32),
        grid_spec=pltpu.PrefetchScalarGridSpec(
            num_scalar_prefetch=0,
            grid=(num_tiles,),
            in_specs=in_specs,
            out_specs=pl.BlockSpec((O, tile_e), lambda i: (0, i)),
        ),
        compiler_params=pltpu.CompilerParams(
            dimension_semantics=("parallel",),
        ),
        cost_estimate=cost,
    )(*edge_inputs, *param_inputs)

    return out_t[:, :E].T                    # (E, O)


# ----------------------------- pure-JAX reference -----------------------------
def _mlp_ref(x, layers):
    for i, (W, b) in enumerate(layers):
        x = x @ W.T + b
        if i < len(layers) - 1:
            x = jnp.maximum(x, 0.0)
    return x


def _reference(z, pos, edge_label_index, rel, link_layers, lin_layers):
    head = z[edge_label_index[0]]
    tail = z[edge_label_index[1]]
    start = pos[edge_label_index[0]]
    end = pos[edge_label_index[1]]
    min_xyz = jnp.min(pos, axis=0)
    max_xyz = jnp.max(pos, axis=0)
    directions = end - start
    distances = jnp.sqrt(jnp.sum(directions ** 2, axis=1)).reshape(-1, 1)
    directions_normed = directions / (distances + 1e-8)
    max_distance = jnp.sqrt(jnp.sum((max_xyz - min_xyz) ** 2))
    distances = distances / max_distance
    link_feat = jnp.concatenate([distances, directions_normed], axis=-1)
    link_emb = _mlp_ref(link_feat, link_layers)
    x = jnp.concatenate([head * rel * tail, link_emb], axis=-1)
    return _mlp_ref(x, lin_layers)


if __name__ == "__main__":
    key = jax.random.PRNGKey(0)

    num_nodes = 64
    C = 32            # embedding_channels
    O = 1             # output_channels
    E = 600           # edge count (not a tile multiple -> exercises padding + multi-step grid)

    keys = jax.random.split(key, 16)
    z = jax.random.normal(keys[0], (num_nodes, C), dtype=jnp.float32)
    pos = jax.random.uniform(keys[1], (num_nodes, 3), dtype=jnp.float32) * 10.0
    edge_label_index = jax.random.randint(keys[2], (2, E), 0, num_nodes, dtype=jnp.int32)

    rel = jax.random.normal(keys[3], (C,), dtype=jnp.float32) * 0.3

    def xavier(k, shape):
        fan_out, fan_in = shape
        lim = jnp.sqrt(6.0 / (fan_in + fan_out))
        return jax.random.uniform(k, shape, jnp.float32, -lim, lim)

    # link_lin = MLP([4, 16, 32, 16, 1])   (random small biases to exercise the bias path)
    lw1 = xavier(keys[4], (16, 4));   lb1 = jax.random.normal(keys[5], (16,)) * 0.01
    lw2 = xavier(keys[6], (32, 16));  lb2 = jax.random.normal(keys[7], (32,)) * 0.01
    lw3 = xavier(keys[8], (16, 32));  lb3 = jax.random.normal(keys[9], (16,)) * 0.01
    lw4 = xavier(keys[10], (1, 16));  lb4 = jax.random.normal(keys[11], (1,)) * 0.01

    # lin = MLP([C + 1, C, O])
    w1 = xavier(keys[12], (C, C + 1)); b1 = jax.random.normal(keys[13], (C,)) * 0.01
    w2 = xavier(keys[14], (O, C));     b2 = jax.random.normal(keys[15], (O,)) * 0.01

    out = spatial_distmult_decoder_forward(
        z, pos, edge_label_index, rel,
        lw1, lb1, lw2, lb2, lw3, lb3, lw4, lb4,
        w1, b1, w2, b2)
    out = jax.block_until_ready(out)
    assert out.shape == (E, O), out.shape

    link_layers = [(lw1, lb1), (lw2, lb2), (lw3, lb3), (lw4, lb4)]
    lin_layers = [(w1, b1), (w2, b2)]

    # Fair comparison: reference with the same bf16-quantized head/tail embeddings
    # (bf16 is the deliberate storage format for the dominant HBM stream).
    z_q = z.astype(jnp.bfloat16).astype(jnp.float32)
    ref_q = _reference(z_q, pos, edge_label_index, rel, link_layers, lin_layers)
    err_q = float(jnp.max(jnp.abs(out - ref_q)))
    assert jnp.allclose(out, ref_q, atol=1e-2, rtol=1e-2), f"mismatch vs bf16-quantized reference: {err_q}"

    # Sanity check against the exact f32 reference (loose: bf16 storage of z).
    ref_f = _reference(z, pos, edge_label_index, rel, link_layers, lin_layers)
    err_f = float(jnp.max(jnp.abs(out - ref_f)))
    assert jnp.allclose(out, ref_f, atol=1e-1, rtol=1e-1), f"mismatch vs f32 reference: {err_f}"

    print("KERNEL_OK")
</pallas_src>

<mosaic_0001>
module attributes {stable_mosaic.version = 11 : i64} {
  func.func @_spatial_distmult_kernel(%arg0: i32, %arg1: memref<32x128xbf16, #tpu.memory_space<vmem>>, %arg2: memref<32x128xbf16, #tpu.memory_space<vmem>>, %arg3: memref<3x128xf32, #tpu.memory_space<vmem>>, %arg4: memref<3x128xf32, #tpu.memory_space<vmem>>, %arg5: memref<32x1xf32, #tpu.memory_space<vmem>>, %arg6: memref<16x4xf32, #tpu.memory_space<vmem>>, %arg7: memref<16x1xf32, #tpu.memory_space<vmem>>, %arg8: memref<32x16xf32, #tpu.memory_space<vmem>>, %arg9: memref<32x1xf32, #tpu.memory_space<vmem>>, %arg10: memref<16x32xf32, #tpu.memory_space<vmem>>, %arg11: memref<16x1xf32, #tpu.memory_space<vmem>>, %arg12: memref<1x16xf32, #tpu.memory_space<vmem>>, %arg13: memref<1x1xf32, #tpu.memory_space<vmem>>, %arg14: memref<32x32xf32, #tpu.memory_space<vmem>>, %arg15: memref<32x1xf32, #tpu.memory_space<vmem>>, %arg16: memref<32x1xf32, #tpu.memory_space<vmem>>, %arg17: memref<1x32xf32, #tpu.memory_space<vmem>>, %arg18: memref<1x1xf32, #tpu.memory_space<vmem>>, %arg19: memref<1x128xf32, #tpu.memory_space<vmem>>) attributes {dimension_semantics = [#tpu.dimension_semantics<parallel>], iteration_bounds = array<i64: 5>, scalar_prefetch = 0 : i64, scratch_operands = 0 : i64, tpu.core_type = #tpu.core_type<tc>, window_params = [{transform_indices = @transform_0, window_bounds = array<i64: 32, 128>}, {transform_indices = @transform_1, window_bounds = array<i64: 32, 128>}, {transform_indices = @transform_2, window_bounds = array<i64: 3, 128>}, {transform_indices = @transform_3, window_bounds = array<i64: 3, 128>}, {pipeline_mode = #tpu.pipeline_mode<synchronous>, transform_indices = @transform_4, window_bounds = array<i64: 32, 1>}, {pipeline_mode = #tpu.pipeline_mode<synchronous>, transform_indices = @transform_5, window_bounds = array<i64: 16, 4>}, {pipeline_mode = #tpu.pipeline_mode<synchronous>, transform_indices = @transform_6, window_bounds = array<i64: 16, 1>}, {pipeline_mode = #tpu.pipeline_mode<synchronous>, transform_indices = @transform_7, window_bounds = array<i64: 32, 16>}, {pipeline_mode = #tpu.pipeline_mode<synchronous>, transform_indices = @transform_8, window_bounds = array<i64: 32, 1>}, {pipeline_mode = #tpu.pipeline_mode<synchronous>, transform_indices = @transform_9, window_bounds = array<i64: 16, 32>}, {pipeline_mode = #tpu.pipeline_mode<synchronous>, transform_indices = @transform_10, window_bounds = array<i64: 16, 1>}, {pipeline_mode = #tpu.pipeline_mode<synchronous>, transform_indices = @transform_11, window_bounds = array<i64: 1, 16>}, {pipeline_mode = #tpu.pipeline_mode<synchronous>, transform_indices = @transform_12, window_bounds = array<i64: 1, 1>}, {pipeline_mode = #tpu.pipeline_mode<synchronous>, transform_indices = @transform_13, window_bounds = array<i64: 32, 32>}, {pipeline_mode = #tpu.pipeline_mode<synchronous>, transform_indices = @transform_14, window_bounds = array<i64: 32, 1>}, {pipeline_mode = #tpu.pipeline_mode<synchronous>, transform_indices = @transform_15, window_bounds = array<i64: 32, 1>}, {pipeline_mode = #tpu.pipeline_mode<synchronous>, transform_indices = @transform_16, window_bounds = array<i64: 1, 32>}, {pipeline_mode = #tpu.pipeline_mode<synchronous>, transform_indices = @transform_17, window_bounds = array<i64: 1, 1>}, {transform_indices = @transform_18, window_bounds = array<i64: 1, 128>}]} {
    %c0 = arith.constant 0 : index
    %c0_0 = arith.constant 0 : index
    %0 = vector.load %arg4[%c0, %c0_0] : memref<3x128xf32, #tpu.memory_space<vmem>>, vector<3x128xf32>
    %c0_1 = arith.constant 0 : index
    %c0_2 = arith.constant 0 : index
    %1 = vector.load %arg3[%c0_1, %c0_2] : memref<3x128xf32, #tpu.memory_space<vmem>>, vector<3x128xf32>
    %2 = arith.subf %0, %1 : vector<3x128xf32>
    %3 = arith.mulf %2, %2 : vector<3x128xf32>
    %4 = vector.extract_strided_slice %3 {offsets = [0, 0], sizes = [1, 128], strides = [1, 1]} : vector<3x128xf32> to vector<1x128xf32>
    %5 = vector.extract_strided_slice %3 {offsets = [1, 0], sizes = [1, 128], strides = [1, 1]} : vector<3x128xf32> to vector<1x128xf32>
    %6 = arith.addf %4, %5 : vector<1x128xf32>
    %7 = vector.extract_strided_slice %3 {offsets = [2, 0], sizes = [1, 128], strides = [1, 1]} : vector<3x128xf32> to vector<1x128xf32>
    %8 = arith.addf %6, %7 : vector<1x128xf32>
    %9 = math.sqrt %8 : vector<1x128xf32>
    %cst = arith.constant 9.99999993E-9 : f32
    %10 = vector.broadcast %cst : f32 to vector<1x128xf32>
    %11 = arith.addf %9, %10 : vector<1x128xf32>
    %12 = tpu.reciprocal %11 {approx = true} : vector<1x128xf32> -> vector<1x128xf32>
    %13 = vector.broadcast %12 : vector<1x128xf32> to vector<3x128xf32>
    %14 = arith.mulf %2, %13 : vector<3x128xf32>
    %c0_3 = arith.constant 0 : index
    %c0_4 = arith.constant 0 : index
    %15 = vector.load %arg6[%c0_3, %c0_4] : memref<16x4xf32, #tpu.memory_space<vmem>>, vector<16x4xf32>
    %c0_5 = arith.constant 0 : index
    %c0_6 = arith.constant 0 : index
    %16 = vector.load %arg7[%c0_5, %c0_6] : memref<16x1xf32, #tpu.memory_space<vmem>>, vector<16x1xf32>
    %17 = vector.extract_strided_slice %15 {offsets = [0, 0], sizes = [16, 1], strides = [1, 1]} : vector<16x4xf32> to vector<16x1xf32>
    %18 = vector.broadcast %17 : vector<16x1xf32> to vector<16x128xf32>
    %19 = vector.broadcast %9 : vector<1x128xf32> to vector<16x128xf32>
    %20 = arith.mulf %18, %19 : vector<16x128xf32>
    %21 = vector.broadcast %16 : vector<16x1xf32> to vector<16x128xf32>
    %22 = arith.addf %21, %20 : vector<16x128xf32>
    %23 = vector.extract_strided_slice %15 {offsets = [0, 1], sizes = [16, 1], strides = [1, 1]} : vector<16x4xf32> to vector<16x1xf32>
    %24 = vector.extract_strided_slice %14 {offsets = [0, 0], sizes = [1, 128], strides = [1, 1]} : vector<3x128xf32> to vector<1x128xf32>
    %25 = vector.broadcast %23 : vector<16x1xf32> to vector<16x128xf32>
    %26 = vector.broadcast %24 : vector<1x128xf32> to vector<16x128xf32>
    %27 = arith.mulf %25, %26 : vector<16x128xf32>
    %28 = arith.addf %22, %27 : vector<16x128xf32>
    %29 = vector.extract_strided_slice %15 {offsets = [0, 2], sizes = [16, 1], strides = [1, 1]} : vector<16x4xf32> to vector<16x1xf32>
    %30 = vector.extract_strided_slice %14 {offsets = [1, 0], sizes = [1, 128], strides = [1, 1]} : vector<3x128xf32> to vector<1x128xf32>
    %31 = vector.broadcast %29 : vector<16x1xf32> to vector<16x128xf32>
    %32 = vector.broadcast %30 : vector<1x128xf32> to vector<16x128xf32>
    %33 = arith.mulf %31, %32 : vector<16x128xf32>
    %34 = arith.addf %28, %33 : vector<16x128xf32>
    %35 = vector.extract_strided_slice %15 {offsets = [0, 3], sizes = [16, 1], strides = [1, 1]} : vector<16x4xf32> to vector<16x1xf32>
    %36 = vector.extract_strided_slice %14 {offsets = [2, 0], sizes = [1, 128], strides = [1, 1]} : vector<3x128xf32> to vector<1x128xf32>
    %37 = vector.broadcast %35 : vector<16x1xf32> to vector<16x128xf32>
    %38 = vector.broadcast %36 : vector<1x128xf32> to vector<16x128xf32>
    %39 = arith.mulf %37, %38 : vector<16x128xf32>
    %40 = arith.addf %34, %39 : vector<16x128xf32>
    %cst_7 = arith.constant 0.000000e+00 : f32
    %41 = vector.broadcast %cst_7 : f32 to vector<16x128xf32>
    %42 = arith.maximumf %40, %41 : vector<16x128xf32>
    %c0_8 = arith.constant 0 : index
    %c0_9 = arith.constant 0 : index
    %43 = vector.load %arg8[%c0_8, %c0_9] : memref<32x16xf32, #tpu.memory_space<vmem>>, vector<32x16xf32>
    %cst_10 = arith.constant dense<0.000000e+00> : vector<32x128xf32>
    %44 = tpu.matmul %43, %42, %cst_10 {dimension_numbers = #tpu.dot_dimension_numbers<[1], [0], [0], [1], [0, 0, 1, 1], [], []>} : vector<32x16xf32>, vector<16x128xf32>, vector<32x128xf32> -> vector<32x128xf32>
    %c0_11 = arith.constant 0 : index
    %c0_12 = arith.constant 0 : index
    %45 = vector.load %arg9[%c0_11, %c0_12] : memref<32x1xf32, #tpu.memory_space<vmem>>, vector<32x1xf32>
    %46 = vector.broadcast %45 : vector<32x1xf32> to vector<32x128xf32>
    %47 = arith.addf %44, %46 : vector<32x128xf32>
    %cst_13 = arith.constant 0.000000e+00 : f32
    %48 = vector.broadcast %cst_13 : f32 to vector<32x128xf32>
    %49 = arith.maximumf %47, %48 : vector<32x128xf32>
    %c0_14 = arith.constant 0 : index
    %c0_15 = arith.constant 0 : index
    %50 = vector.load %arg10[%c0_14, %c0_15] : memref<16x32xf32, #tpu.memory_space<vmem>>, vector<16x32xf32>
    %cst_16 = arith.constant dense<0.000000e+00> : vector<16x128xf32>
    %51 = tpu.matmul %50, %49, %cst_16 {dimension_numbers = #tpu.dot_dimension_numbers<[1], [0], [0], [1], [0, 0, 1, 1], [], []>} : vector<16x32xf32>, vector<32x128xf32>, vector<16x128xf32> -> vector<16x128xf32>
    %c0_17 = arith.constant 0 : index
    %c0_18 = arith.constant 0 : index
    %52 = vector.load %arg11[%c0_17, %c0_18] : memref<16x1xf32, #tpu.memory_space<vmem>>, vector<16x1xf32>
    %53 = vector.broadcast %52 : vector<16x1xf32> to vector<16x128xf32>
    %54 = arith.addf %51, %53 : vector<16x128xf32>
    %cst_19 = arith.constant 0.000000e+00 : f32
    %55 = vector.broadcast %cst_19 : f32 to vector<16x128xf32>
    %56 = arith.maximumf %54, %55 : vector<16x128xf32>
    %c0_20 = arith.constant 0 : index
    %c0_21 = arith.constant 0 : index
    %57 = vector.load %arg12[%c0_20, %c0_21] : memref<1x16xf32, #tpu.memory_space<vmem>>, vector<1x16xf32>
    %cst_22 = arith.constant dense<0.000000e+00> : vector<1x128xf32>
    %58 = tpu.matmul %57, %56, %cst_22 {dimension_numbers = #tpu.dot_dimension_numbers<[1], [0], [0], [1], [0, 0, 1, 1], [], []>} : vector<1x16xf32>, vector<16x128xf32>, vector<1x128xf32> -> vector<1x128xf32>
    %c0_23 = arith.constant 0 : index
    %c0_24 = arith.constant 0 : index
    %59 = vector.load %arg13[%c0_23, %c0_24] : memref<1x1xf32, #tpu.memory_space<vmem>>, vector<1x1xf32>
    %60 = vector.broadcast %59 : vector<1x1xf32> to vector<1x128xf32>
    %61 = arith.addf %58, %60 : vector<1x128xf32>
    %c0_25 = arith.constant 0 : index
    %c0_26 = arith.constant 0 : index
    %62 = vector.load %arg1[%c0_25, %c0_26] : memref<32x128xbf16, #tpu.memory_space<vmem>>, vector<32x128xbf16>
    %63 = arith.extf %62 : vector<32x128xbf16> to vector<32x128xf32>
    %c0_27 = arith.constant 0 : index
    %c0_28 = arith.constant 0 : index
    %64 = vector.load %arg2[%c0_27, %c0_28] : memref<32x128xbf16, #tpu.memory_space<vmem>>, vector<32x128xbf16>
    %65 = arith.extf %64 : vector<32x128xbf16> to vector<32x128xf32>
    %c0_29 = arith.constant 0 : index
    %c0_30 = arith.constant 0 : index
    %66 = vector.load %arg5[%c0_29, %c0_30] : memref<32x1xf32, #tpu.memory_space<vmem>>, vector<32x1xf32>
    %67 = vector.broadcast %66 : vector<32x1xf32> to vector<32x128xf32>
    %68 = arith.mulf %63, %67 : vector<32x128xf32>
    %69 = arith.mulf %68, %65 : vector<32x128xf32>
    %c0_31 = arith.constant 0 : index
    %c0_32 = arith.constant 0 : index
    %70 = vector.load %arg14[%c0_31, %c0_32] : memref<32x32xf32, #tpu.memory_space<vmem>>, vector<32x32xf32>
    %cst_33 = arith.constant dense<0.000000e+00> : vector<32x128xf32>
    %71 = tpu.matmul %70, %69, %cst_33 {dimension_numbers = #tpu.dot_dimension_numbers<[1], [0], [0], [1], [0, 0, 1, 1], [], []>} : vector<32x32xf32>, vector<32x128xf32>, vector<32x128xf32> -> vector<32x128xf32>
    %c0_34 = arith.constant 0 : index
    %c0_35 = arith.constant 0 : index
    %72 = vector.load %arg15[%c0_34, %c0_35] : memref<32x1xf32, #tpu.memory_space<vmem>>, vector<32x1xf32>
    %73 = vector.broadcast %72 : vector<32x1xf32> to vector<32x128xf32>
    %74 = vector.broadcast %61 : vector<1x128xf32> to vector<32x128xf32>
    %75 = arith.mulf %73, %74 : vector<32x128xf32>
    %76 = arith.addf %71, %75 : vector<32x128xf32>
    %c0_36 = arith.constant 0 : index
    %c0_37 = arith.constant 0 : index
    %77 = vector.load %arg16[%c0_36, %c0_37] : memref<32x1xf32, #tpu.memory_space<vmem>>, vector<32x1xf32>
    %78 = vector.broadcast %77 : vector<32x1xf32> to vector<32x128xf32>
    %79 = arith.addf %76, %78 : vector<32x128xf32>
    %cst_38 = arith.constant 0.000000e+00 : f32
    %80 = vector.broadcast %cst_38 : f32 to vector<32x128xf32>
    %81 = arith.maximumf %79, %80 : vector<32x128xf32>
    %c0_39 = arith.constant 0 : index
    %c0_40 = arith.constant 0 : index
    %82 = vector.load %arg17[%c0_39, %c0_40] : memref<1x32xf32, #tpu.memory_space<vmem>>, vector<1x32xf32>
    %cst_41 = arith.constant dense<0.000000e+00> : vector<1x128xf32>
    %83 = tpu.matmul %82, %81, %cst_41 {dimension_numbers = #tpu.dot_dimension_numbers<[1], [0], [0], [1], [0, 0, 1, 1], [], []>} : vector<1x32xf32>, vector<32x128xf32>, vector<1x128xf32> -> vector<1x128xf32>
    %c0_42 = arith.constant 0 : index
    %c0_43 = arith.constant 0 : index
    %84 = vector.load %arg18[%c0_42, %c0_43] : memref<1x1xf32, #tpu.memory_space<vmem>>, vector<1x1xf32>
    %85 = vector.broadcast %84 : vector<1x1xf32> to vector<1x128xf32>
    %86 = arith.addf %83, %85 : vector<1x128xf32>
    %c0_44 = arith.constant 0 : index
    %c0_45 = arith.constant 0 : index
    %87 = vector.load %arg19[%c0_44, %c0_45] : memref<1x128xf32, #tpu.memory_space<vmem>>, vector<1x128xf32>
    tpu.vector_store %arg19[%c0_44, %c0_45], %86 {strides = array<i32>} : memref<1x128xf32, #tpu.memory_space<vmem>>, vector<1x128xf32>,
    return
  }
  func.func @transform_0(%arg0: i32) -> (i32, i32) {
    %c0_i32 = arith.constant 0 : i32
    %c0_i32_0 = arith.constant 0 : i32
    return %c0_i32, %arg0 : i32, i32
  }
  func.func @transform_1(%arg0: i32) -> (i32, i32) {
    %c0_i32 = arith.constant 0 : i32
    %c0_i32_0 = arith.constant 0 : i32
    return %c0_i32, %arg0 : i32, i32
  }
  func.func @transform_2(%arg0: i32) -> (i32, i32) {
    %c0_i32 = arith.constant 0 : i32
    %c0_i32_0 = arith.constant 0 : i32
    return %c0_i32, %arg0 : i32, i32
  }
  func.func @transform_3(%arg0: i32) -> (i32, i32) {
    %c0_i32 = arith.constant 0 : i32
    %c0_i32_0 = arith.constant 0 : i32
    return %c0_i32, %arg0 : i32, i32
  }
  func.func @transform_4(%arg0: i32) -> (i32, i32) {
    %c0_i32 = arith.constant 0 : i32
    %c0_i32_0 = arith.constant 0 : i32
    %c0_i32_1 = arith.constant 0 : i32
    return %c0_i32, %c0_i32_0 : i32, i32
  }
  func.func @transform_5(%arg0: i32) -> (i32, i32) {
    %c0_i32 = arith.constant 0 : i32
    %c0_i32_0 = arith.constant 0 : i32
    %c0_i32_1 = arith.constant 0 : i32
    return %c0_i32, %c0_i32_0 : i32, i32
  }
  func.func @transform_6(%arg0: i32) -> (i32, i32) {
    %c0_i32 = arith.constant 0 : i32
    %c0_i32_0 = arith.constant 0 : i32
    %c0_i32_1 = arith.constant 0 : i32
    return %c0_i32, %c0_i32_0 : i32, i32
  }
  func.func @transform_7(%arg0: i32) -> (i32, i32) {
    %c0_i32 = arith.constant 0 : i32
    %c0_i32_0 = arith.constant 0 : i32
    %c0_i32_1 = arith.constant 0 : i32
    return %c0_i32, %c0_i32_0 : i32, i32
  }
  func.func @transform_8(%arg0: i32) -> (i32, i32) {
    %c0_i32 = arith.constant 0 : i32
    %c0_i32_0 = arith.constant 0 : i32
    %c0_i32_1 = arith.constant 0 : i32
    return %c0_i32, %c0_i32_0 : i32, i32
  }
  func.func @transform_9(%arg0: i32) -> (i32, i32) {
    %c0_i32 = arith.constant 0 : i32
    %c0_i32_0 = arith.constant 0 : i32
    %c0_i32_1 = arith.constant 0 : i32
    return %c0_i32, %c0_i32_0 : i32, i32
  }
  func.func @transform_10(%arg0: i32) -> (i32, i32) {
    %c0_i32 = arith.constant 0 : i32
    %c0_i32_0 = arith.constant 0 : i32
    %c0_i32_1 = arith.constant 0 : i32
    return %c0_i32, %c0_i32_0 : i32, i32
  }
  func.func @transform_11(%arg0: i32) -> (i32, i32) {
    %c0_i32 = arith.constant 0 : i32
    %c0_i32_0 = arith.constant 0 : i32
    %c0_i32_1 = arith.constant 0 : i32
    return %c0_i32, %c0_i32_0 : i32, i32
  }
  func.func @transform_12(%arg0: i32) -> (i32, i32) {
    %c0_i32 = arith.constant 0 : i32
    %c0_i32_0 = arith.constant 0 : i32
    %c0_i32_1 = arith.constant 0 : i32
    return %c0_i32, %c0_i32_0 : i32, i32
  }
  func.func @transform_13(%arg0: i32) -> (i32, i32) {
    %c0_i32 = arith.constant 0 : i32
    %c0_i32_0 = arith.constant 0 : i32
    %c0_i32_1 = arith.constant 0 : i32
    return %c0_i32, %c0_i32_0 : i32, i32
  }
  func.func @transform_14(%arg0: i32) -> (i32, i32) {
    %c0_i32 = arith.constant 0 : i32
    %c0_i32_0 = arith.constant 0 : i32
    %c0_i32_1 = arith.constant 0 : i32
    return %c0_i32, %c0_i32_0 : i32, i32
  }
  func.func @transform_15(%arg0: i32) -> (i32, i32) {
    %c0_i32 = arith.constant 0 : i32
    %c0_i32_0 = arith.constant 0 : i32
    %c0_i32_1 = arith.constant 0 : i32
    return %c0_i32, %c0_i32_0 : i32, i32
  }
  func.func @transform_16(%arg0: i32) -> (i32, i32) {
    %c0_i32 = arith.constant 0 : i32
    %c0_i32_0 = arith.constant 0 : i32
    %c0_i32_1 = arith.constant 0 : i32
    return %c0_i32, %c0_i32_0 : i32, i32
  }
  func.func @transform_17(%arg0: i32) -> (i32, i32) {
    %c0_i32 = arith.constant 0 : i32
    %c0_i32_0 = arith.constant 0 : i32
    %c0_i32_1 = arith.constant 0 : i32
    return %c0_i32, %c0_i32_0 : i32, i32
  }
  func.func @transform_18(%arg0: i32) -> (i32, i32) {
    %c0_i32 = arith.constant 0 : i32
    %c0_i32_0 = arith.constant 0 : i32
    return %c0_i32, %arg0 : i32, i32
  }
}

</mosaic_0001>

<llo_original>
// kernel: tpu_custom_call.1
$region0: #{tpu_custom_call.1}
  #allocation0 [shape = 'u32[]', space=smem, size = 0x4, offset = 0x4, fixed_abs, tag = 'smem constant byte address 0x4 - core index']
  #allocation1 [shape = 'u32[144,128]{1,0:T(1,128)}', space=vmem, size = 0x12000, scoped, tag = 'internal scratch']
  #allocation2 [shape = 'f32[1,1]{1,0:T(1,128)S(1)}', space=vmem, size = 0x200, scoped, tag = 'scoped memory for tpu_custom_call.1']
  #allocation3 [shape = 'f32[1,1]{1,0:T(1,128)S(1)}', space=vmem, size = 0x200, scoped, tag = 'scoped memory for tpu_custom_call.1']
  %s0 = inlined_call_operand.vmem [shape: bf16[32,640], index: 0, kind: input, shape index: {}]
  %s1 = inlined_call_operand.vmem [shape: bf16[32,640], index: 1, kind: input, shape index: {}]
  %s2 = inlined_call_operand.vmem [shape: f32[3,640], index: 2, kind: input, shape index: {}]
  %s3 = inlined_call_operand.vmem [shape: f32[3,640], index: 3, kind: input, shape index: {}]
  %s4 = inlined_call_operand.vmem [shape: f32[32,1], index: 4, kind: input, shape index: {}]
  %s5 = inlined_call_operand.vmem [shape: f32[16,4], index: 5, kind: input, shape index: {}]
  %s6 = inlined_call_operand.vmem [shape: f32[16,1], index: 6, kind: input, shape index: {}]
  %s7 = inlined_call_operand.vmem [shape: f32[32,16], index: 7, kind: input, shape index: {}]
  %s8 = inlined_call_operand.vmem [shape: f32[32,1], index: 8, kind: input, shape index: {}]
  %s9 = inlined_call_operand.vmem [shape: f32[16,32], index: 9, kind: input, shape index: {}]
  %s10 = inlined_call_operand.vmem [shape: f32[16,1], index: 10, kind: input, shape index: {}]
  %s11 = inlined_call_operand.vmem [shape: f32[1,16], index: 11, kind: input, shape index: {}]
  %s12 = inlined_call_operand.<no memory space> [shape: f32[1,1], index: 12, kind: input, shape index: {}]
  %s13 = inlined_call_operand.vmem [shape: f32[32,32], index: 13, kind: input, shape index: {}]
  %s14 = inlined_call_operand.vmem [shape: f32[32,1], index: 14, kind: input, shape index: {}]
  %s15 = inlined_call_operand.vmem [shape: f32[32,1], index: 15, kind: input, shape index: {}]
  %s16 = inlined_call_operand.vmem [shape: f32[1,32], index: 16, kind: input, shape index: {}]
  %s17 = inlined_call_operand.<no memory space> [shape: f32[1,1], index: 17, kind: input, shape index: {}]
  %s18 = inlined_call_operand.hbm [shape: f32[1,640], index: 18, kind: output, shape index: {}]
  %s19 = sld [smem:[#allocation0]]
  $region187: #{tpu_custom_call.1} parent=0
    _
  %s21 = ssub.s32 1, %s19
  %s22 = scalar_select 0, %s21, %s19
  %v23 = vstv %s12
  %24 = vst [vmem:[#allocation2] sm:$0x1] %v23
  %v25 = vstv %s17
  %26 = vst [vmem:[#allocation3] sm:$0x1] %v25
  $region1: #{tpu_custom_call.1} parent=0
    #allocation4 [shape = 'u8[16384]{0}', space=vmem, size = 0x4000, scoped, tag = 'input window, operand 0']
    #allocation5 [shape = 'u8[16384]{0}', space=vmem, size = 0x4000, scoped, tag = 'input window, operand 1']
    #allocation6 [shape = 'u8[1024]{0}', space=vmem, size = 0x400, scoped, tag = 'output window, operand 0']
    #allocation7 [shape = 's32[2]{0}', space=sflag, size = 0x8, scoped, tag = 'scoped memory for tpu_custom_call.1']
    %27 = vsyncpa [#allocation7], 0
    %s28 = scalar_lea.sflag [#allocation7], 1
    %29 = vsyncpa %s28, 0
    loop: start=0, step=1, limit=7
    $region2: #{tpu_custom_call.1} parent=1 // loop_pre_header
      _
    $region3: #{tpu_custom_call.1} parent=1 // loop_header
      %s31 = sphi 0, %s35
      %p32 = scmp.ge.s32.totalorder %s31, 7
      %s41 = sphi 0, %s43
      %s44 = sphi 0, %s41
      %s45 = sphi 0, %s44
      %s61 = sphi 0, %s45
      %s67 = sphi 0, %s69
      %s70 = sphi 0, %s67
      %s71 = sphi 0, %s70
      %s87 = sphi 0, %s71
      %s93 = sphi 0, %s95
      %s96 = sphi 0, %s93
      %s97 = sphi 0, %s96
      %s113 = sphi 0, %s97
      %s119 = sphi 0, %s121
      %s122 = sphi 0, %s119
      %s123 = sphi 0, %s122
      %s139 = sphi 0, %s123
      %s143 = sphi 0, %s143
      %s145 = sphi 0, %s143
      %s146 = sphi 0, %s145
      %s160 = sphi 0, %s146
      %s164 = sphi 0, %s164
      %s166 = sphi 0, %s164
      %s167 = sphi 0, %s166
      %s181 = sphi 0, %s167
      %s185 = sphi 0, %s185
      %s187 = sphi 0, %s185
      %s188 = sphi 0, %s187
      %s202 = sphi 0, %s188
      %s206 = sphi 0, %s206
      %s208 = sphi 0, %s206
      %s209 = sphi 0, %s208
      %s223 = sphi 0, %s209
      %s227 = sphi 0, %s227
      %s229 = sphi 0, %s227
      %s230 = sphi 0, %s229
      %s244 = sphi 0, %s230
      %s248 = sphi 0, %s248
      %s250 = sphi 0, %s248
      %s251 = sphi 0, %s250
      %s265 = sphi 0, %s251
      %s269 = sphi 0, %s269
      %s271 = sphi 0, %s269
      %s272 = sphi 0, %s271
      %s286 = sphi 0, %s272
      %s290 = sphi 0, %s290
      %s292 = sphi 0, %s290
      %s293 = sphi 0, %s292
      %s307 = sphi 0, %s293
      %s311 = sphi 0, %s311
      %s313 = sphi 0, %s311
      %s314 = sphi 0, %s313
      %s328 = sphi 0, %s314
      %s332 = sphi 0, %s332
      %s334 = sphi 0, %s332
      %s335 = sphi 0, %s334
      %s349 = sphi 0, %s335
      %s353 = sphi 0, %s353
      %s355 = sphi 0, %s353
      %s356 = sphi 0, %s355
      %s370 = sphi 0, %s356
      %s374 = sphi 0, %s374
      %s376 = sphi 0, %s374
      %s377 = sphi 0, %s376
      %s391 = sphi 0, %s377
      %s395 = sphi 0, %s395
      %s397 = sphi 0, %s395
      %s398 = sphi 0, %s397
      %s412 = sphi 0, %s398
      %s416 = sphi 0, %s416
      %s418 = sphi 0, %s416
      %s419 = sphi 0, %s418
      %s433 = sphi 0, %s419
      %s439 = sphi 0, %s441
      %s442 = sphi 0, %s439
      %s443 = sphi 0, %s442
      %s459 = sphi 0, %s443
    $region4: #{tpu_custom_call.1} parent=1 // loop_header_branch
      %34 = sbr.rel (%p32) target = $region8
    $region5: #{tpu_custom_call.1} parent=1 // loop_body
      %s36 = ssub.s32 %s31, 1
      %s37 = ssub.s32 %s31, 2
      %s38 = sadd.s32 %s31, 1
      %s39 = ssub.s32 %s31, %s38
      %p40 = scmp.eq.s32.totalorder %s39, 0
      %s42 = sadd.s32 %s41, 1
      %s43 = scalar_select %p40, %s41, %s42
      %p46 = pneg %p40
      %p47 = scmp.eq.s32.totalorder %s31, 4
      %p48 = por %p46, %p47
      %p49 = scmp.ne.s32.totalorder %s41, %s44
      %p50 = scmp.eq.s32.totalorder %s31, 0
      %p51 = por %p49, %p50
      %p52 = scmp.ne.s32.totalorder %s41, %s44
      %p53 = scmp.eq.s32.totalorder %s36, 4
      %p54 = por %p52, %p53
      %p55 = scmp.ne.s32.totalorder %s44, %s45
      %p56 = scmp.eq.s32.totalorder %s36, 0
      %p57 = por %p55, %p56
      %p58 = scmp.ne.s32.totalorder %s44, %s45
      %p59 = scmp.eq.s32.totalorder %s37, 4
      %p60 = por %p58, %p59
      %p62 = scmp.ne.s32.totalorder %s45, %s61
      %p63 = scmp.eq.s32.totalorder %s37, 0
      %p64 = por %p62, %p63
      %s65 = ssub.s32 %s31, %s38
      %p66 = scmp.eq.s32.totalorder %s65, 0
      %s68 = sadd.s32 %s67, 1
      %s69 = scalar_select %p66, %s67, %s68
      %p72 = pneg %p66
      %p73 = scmp.eq.s32.totalorder %s31, 4
      %p74 = por %p72, %p73
      %p75 = scmp.ne.s32.totalorder %s67, %s70
      %p76 = scmp.eq.s32.totalorder %s31, 0
      %p77 = por %p75, %p76
      %p78 = scmp.ne.s32.totalorder %s67, %s70
      %p79 = scmp.eq.s32.totalorder %s36, 4
      %p80 = por %p78, %p79
      %p81 = scmp.ne.s32.totalorder %s70, %s71
      %p82 = scmp.eq.s32.totalorder %s36, 0
      %p83 = por %p81, %p82
      %p84 = scmp.ne.s32.totalorder %s70, %s71
      %p85 = scmp.eq.s32.totalorder %s37, 4
      %p86 = por %p84, %p85
      %p88 = scmp.ne.s32.totalorder %s71, %s87
      %p89 = scmp.eq.s32.totalorder %s37, 0
      %p90 = por %p88, %p89
      %s91 = ssub.s32 %s31, %s38
      %p92 = scmp.eq.s32.totalorder %s91, 0
      %s94 = sadd.s32 %s93, 1
      %s95 = scalar_select %p92, %s93, %s94
      %p98 = pneg %p92
      %p99 = scmp.eq.s32.totalorder %s31, 4
      %p100 = por %p98, %p99
      %p101 = scmp.ne.s32.totalorder %s93, %s96
      %p102 = scmp.eq.s32.totalorder %s31, 0
      %p103 = por %p101, %p102
      %p104 = scmp.ne.s32.totalorder %s93, %s96
      %p105 = scmp.eq.s32.totalorder %s36, 4
      %p106 = por %p104, %p105
      %p107 = scmp.ne.s32.totalorder %s96, %s97
      %p108 = scmp.eq.s32.totalorder %s36, 0
      %p109 = por %p107, %p108
      %p110 = scmp.ne.s32.totalorder %s96, %s97
      %p111 = scmp.eq.s32.totalorder %s37, 4
      %p112 = por %p110, %p111
      %p114 = scmp.ne.s32.totalorder %s97, %s113
      %p115 = scmp.eq.s32.totalorder %s37, 0
      %p116 = por %p114, %p115
      %s117 = ssub.s32 %s31, %s38
      %p118 = scmp.eq.s32.totalorder %s117, 0
      %s120 = sadd.s32 %s119, 1
      %s121 = scalar_select %p118, %s119, %s120
      %p124 = pneg %p118
      %p125 = scmp.eq.s32.totalorder %s31, 4
      %p126 = por %p124, %p125
      %p127 = scmp.ne.s32.totalorder %s119, %s122
      %p128 = scmp.eq.s32.totalorder %s31, 0
      %p129 = por %p127, %p128
      %p130 = scmp.ne.s32.totalorder %s119, %s122
      %p131 = scmp.eq.s32.totalorder %s36, 4
      %p132 = por %p130, %p131
      %p133 = scmp.ne.s32.totalorder %s122, %s123
      %p134 = scmp.eq.s32.totalorder %s36, 0
      %p135 = por %p133, %p134
      %p136 = scmp.ne.s32.totalorder %s122, %s123
      %p137 = scmp.eq.s32.totalorder %s37, 4
      %p138 = por %p136, %p137
      %p140 = scmp.ne.s32.totalorder %s123, %s139
      %p141 = scmp.eq.s32.totalorder %s37, 0
      %p142 = por %p140, %p141
      %s144 = sadd.s32 %s143, 1
      %p147 = scmp.eq.s32.totalorder %s31, 4
      %p148 = scmp.ne.s32.totalorder %s143, %s145
      %p149 = scmp.eq.s32.totalorder %s31, 0
      %p150 = por %p148, %p149
      %p151 = scmp.ne.s32.totalorder %s143, %s145
      %p152 = scmp.eq.s32.totalorder %s36, 4
      %p153 = por %p151, %p152
      %p154 = scmp.ne.s32.totalorder %s145, %s146
      %p155 = scmp.eq.s32.totalorder %s36, 0
      %p156 = por %p154, %p155
      %p157 = scmp.ne.s32.totalorder %s145, %s146
      %p158 = scmp.eq.s32.totalorder %s37, 4
      %p159 = por %p157, %p158
      %p161 = scmp.ne.s32.totalorder %s146, %s160
      %p162 = scmp.eq.s32.totalorder %s37, 0
      %p163 = por %p161, %p162
      %s165 = sadd.s32 %s164, 1
      %p168 = scmp.eq.s32.totalorder %s31, 4
      %p169 = scmp.ne.s32.totalorder %s164, %s166
      %p170 = scmp.eq.s32.totalorder %s31, 0
      %p171 = por %p169, %p170
      %p172 = scmp.ne.s32.totalorder %s164, %s166
      %p173 = scmp.eq.s32.totalorder %s36, 4
      %p174 = por %p172, %p173
      %p175 = scmp.ne.s32.totalorder %s166, %s167
      %p176 = scmp.eq.s32.totalorder %s36, 0
      %p177 = por %p175, %p176
      %p178 = scmp.ne.s32.totalorder %s166, %s167
      %p179 = scmp.eq.s32.totalorder %s37, 4
      %p180 = por %p178, %p179
      %p182 = scmp.ne.s32.totalorder %s167, %s181
      %p183 = scmp.eq.s32.totalorder %s37, 0
      %p184 = por %p182, %p183
      %s186 = sadd.s32 %s185, 1
      %p189 = scmp.eq.s32.totalorder %s31, 4
      %p190 = scmp.ne.s32.totalorder %s185, %s187
      %p191 = scmp.eq.s32.totalorder %s31, 0
      %p192 = por %p190, %p191
      %p193 = scmp.ne.s32.totalorder %s185, %s187
      %p194 = scmp.eq.s32.totalorder %s36, 4
      %p195 = por %p193, %p194
      %p196 = scmp.ne.s32.totalorder %s187, %s188
      %p197 = scmp.eq.s32.totalorder %s36, 0
      %p198 = por %p196, %p197
      %p199 = scmp.ne.s32.totalorder %s187, %s188
      %p200 = scmp.eq.s32.totalorder %s37, 4
      %p201 = por %p199, %p200
      %p203 = scmp.ne.s32.totalorder %s188, %s202
      %p204 = scmp.eq.s32.totalorder %s37, 0
      %p205 = por %p203, %p204
      %s207 = sadd.s32 %s206, 1
      %p210 = scmp.eq.s32.totalorder %s31, 4
      %p211 = scmp.ne.s32.totalorder %s206, %s208
      %p212 = scmp.eq.s32.totalorder %s31, 0
      %p213 = por %p211, %p212
      %p214 = scmp.ne.s32.totalorder %s206, %s208
      %p215 = scmp.eq.s32.totalorder %s36, 4
      %p216 = por %p214, %p215
      %p217 = scmp.ne.s32.totalorder %s208, %s209
      %p218 = scmp.eq.s32.totalorder %s36, 0
      %p219 = por %p217, %p218
      %p220 = scmp.ne.s32.totalorder %s208, %s209
      %p221 = scmp.eq.s32.totalorder %s37, 4
      %p222 = por %p220, %p221
      %p224 = scmp.ne.s32.totalorder %s209, %s223
      %p225 = scmp.eq.s32.totalorder %s37, 0
      %p226 = por %p224, %p225
      %s228 = sadd.s32 %s227, 1
      %p231 = scmp.eq.s32.totalorder %s31, 4
      %p232 = scmp.ne.s32.totalorder %s227, %s229
      %p233 = scmp.eq.s32.totalorder %s31, 0
      %p234 = por %p232, %p233
      %p235 = scmp.ne.s32.totalorder %s227, %s229
      %p236 = scmp.eq.s32.totalorder %s36, 4
      %p237 = por %p235, %p236
      %p238 = scmp.ne.s32.totalorder %s229, %s230
      %p239 = scmp.eq.s32.totalorder %s36, 0
      %p240 = por %p238, %p239
      %p241 = scmp.ne.s32.totalorder %s229, %s230
      %p242 = scmp.eq.s32.totalorder %s37, 4
      %p243 = por %p241, %p242
      %p245 = scmp.ne.s32.totalorder %s230, %s244
      %p246 = scmp.eq.s32.totalorder %s37, 0
      %p247 = por %p245, %p246
      %s249 = sadd.s32 %s248, 1
      %p252 = scmp.eq.s32.totalorder %s31, 4
      %p253 = scmp.ne.s32.totalorder %s248, %s250
      %p254 = scmp.eq.s32.totalorder %s31, 0
      %p255 = por %p253, %p254
      %p256 = scmp.ne.s32.totalorder %s248, %s250
      %p257 = scmp.eq.s32.totalorder %s36, 4
      %p258 = por %p256, %p257
      %p259 = scmp.ne.s32.totalorder %s250, %s251
      %p260 = scmp.eq.s32.totalorder %s36, 0
      %p261 = por %p259, %p260
      %p262 = scmp.ne.s32.totalorder %s250, %s251
      %p263 = scmp.eq.s32.totalorder %s37, 4
      %p264 = por %p262, %p263
      %p266 = scmp.ne.s32.totalorder %s251, %s265
      %p267 = scmp.eq.s32.totalorder %s37, 0
      %p268 = por %p266, %p267
      %s270 = sadd.s32 %s269, 1
      %p273 = scmp.eq.s32.totalorder %s31, 4
      %p274 = scmp.ne.s32.totalorder %s269, %s271
      %p275 = scmp.eq.s32.totalorder %s31, 0
      %p276 = por %p274, %p275
      %p277 = scmp.ne.s32.totalorder %s269, %s271
      %p278 = scmp.eq.s32.totalorder %s36, 4
      %p279 = por %p277, %p278
      %p280 = scmp.ne.s32.totalorder %s271, %s272
      %p281 = scmp.eq.s32.totalorder %s36, 0
      %p282 = por %p280, %p281
      %p283 = scmp.ne.s32.totalorder %s271, %s272
      %p284 = scmp.eq.s32.totalorder %s37, 4
      %p285 = por %p283, %p284
      %p287 = scmp.ne.s32.totalorder %s272, %s286
      %p288 = scmp.eq.s32.totalorder %s37, 0
      %p289 = por %p287, %p288
      %s291 = sadd.s32 %s290, 1
      %p294 = scmp.eq.s32.totalorder %s31, 4
      %p295 = scmp.ne.s32.totalorder %s290, %s292
      %p296 = scmp.eq.s32.totalorder %s31, 0
      %p297 = por %p295, %p296
      %p298 = scmp.ne.s32.totalorder %s290, %s292
      %p299 = scmp.eq.s32.totalorder %s36, 4
      %p300 = por %p298, %p299
      %p301 = scmp.ne.s32.totalorder %s292, %s293
      %p302 = scmp.eq.s32.totalorder %s36, 0
      %p303 = por %p301, %p302
      %p304 = scmp.ne.s32.totalorder %s292, %s293
      %p305 = scmp.eq.s32.totalorder %s37, 4
      %p306 = por %p304, %p305
      %p308 = scmp.ne.s32.totalorder %s293, %s307
      %p309 = scmp.eq.s32.totalorder %s37, 0
      %p310 = por %p308, %p309
      %s312 = sadd.s32 %s311, 1
      %p315 = scmp.eq.s32.totalorder %s31, 4
      %p316 = scmp.ne.s32.totalorder %s311, %s313
      %p317 = scmp.eq.s32.totalorder %s31, 0
      %p318 = por %p316, %p317
      %p319 = scmp.ne.s32.totalorder %s311, %s313
      %p320 = scmp.eq.s32.totalorder %s36, 4
      %p321 = por %p319, %p320
      %p322 = scmp.ne.s32.totalorder %s313, %s314
      %p323 = scmp.eq.s32.totalorder %s36, 0
      %p324 = por %p322, %p323
      %p325 = scmp.ne.s32.totalorder %s313, %s314
      %p326 = scmp.eq.s32.totalorder %s37, 4
      %p327 = por %p325, %p326
      %p329 = scmp.ne.s32.totalorder %s314, %s328
      %p330 = scmp.eq.s32.totalorder %s37, 0
      %p331 = por %p329, %p330
      %s333 = sadd.s32 %s332, 1
      %p336 = scmp.eq.s32.totalorder %s31, 4
      %p337 = scmp.ne.s32.totalorder %s332, %s334
      %p338 = scmp.eq.s32.totalorder %s31, 0
      %p339 = por %p337, %p338
      %p340 = scmp.ne.s32.totalorder %s332, %s334
      %p341 = scmp.eq.s32.totalorder %s36, 4
      %p342 = por %p340, %p341
      %p343 = scmp.ne.s32.totalorder %s334, %s335
      %p344 = scmp.eq.s32.totalorder %s36, 0
      %p345 = por %p343, %p344
      %p346 = scmp.ne.s32.totalorder %s334, %s335
      %p347 = scmp.eq.s32.totalorder %s37, 4
      %p348 = por %p346, %p347
      %p350 = scmp.ne.s32.totalorder %s335, %s349
      %p351 = scmp.eq.s32.totalorder %s37, 0
      %p352 = por %p350, %p351
      %s354 = sadd.s32 %s353, 1
      %p357 = scmp.eq.s32.totalorder %s31, 4
      %p358 = scmp.ne.s32.totalorder %s353, %s355
      %p359 = scmp.eq.s32.totalorder %s31, 0
      %p360 = por %p358, %p359
      %p361 = scmp.ne.s32.totalorder %s353, %s355
      %p362 = scmp.eq.s32.totalorder %s36, 4
      %p363 = por %p361, %p362
      %p364 = scmp.ne.s32.totalorder %s355, %s356
      %p365 = scmp.eq.s32.totalorder %s36, 0
      %p366 = por %p364, %p365
      %p367 = scmp.ne.s32.totalorder %s355, %s356
      %p368 = scmp.eq.s32.totalorder %s37, 4
      %p369 = por %p367, %p368
      %p371 = scmp.ne.s32.totalorder %s356, %s370
      %p372 = scmp.eq.s32.totalorder %s37, 0
      %p373 = por %p371, %p372
      %s375 = sadd.s32 %s374, 1
      %p378 = scmp.eq.s32.totalorder %s31, 4
      %p379 = scmp.ne.s32.totalorder %s374, %s376
      %p380 = scmp.eq.s32.totalorder %s31, 0
      %p381 = por %p379, %p380
      %p382 = scmp.ne.s32.totalorder %s374, %s376
      %p383 = scmp.eq.s32.totalorder %s36, 4
      %p384 = por %p382, %p383
      %p385 = scmp.ne.s32.totalorder %s376, %s377
      %p386 = scmp.eq.s32.totalorder %s36, 0
      %p387 = por %p385, %p386
      %p388 = scmp.ne.s32.totalorder %s376, %s377
      %p389 = scmp.eq.s32.totalorder %s37, 4
      %p390 = por %p388, %p389
      %p392 = scmp.ne.s32.totalorder %s377, %s391
      %p393 = scmp.eq.s32.totalorder %s37, 0
      %p394 = por %p392, %p393
      %s396 = sadd.s32 %s395, 1
      %p399 = scmp.eq.s32.totalorder %s31, 4
      %p400 = scmp.ne.s32.totalorder %s395, %s397
      %p401 = scmp.eq.s32.totalorder %s31, 0
      %p402 = por %p400, %p401
      %p403 = scmp.ne.s32.totalorder %s395, %s397
      %p404 = scmp.eq.s32.totalorder %s36, 4
      %p405 = por %p403, %p404
      %p406 = scmp.ne.s32.totalorder %s397, %s398
      %p407 = scmp.eq.s32.totalorder %s36, 0
      %p408 = por %p406, %p407
      %p409 = scmp.ne.s32.totalorder %s397, %s398
      %p410 = scmp.eq.s32.totalorder %s37, 4
      %p411 = por %p409, %p410
      %p413 = scmp.ne.s32.totalorder %s398, %s412
      %p414 = scmp.eq.s32.totalorder %s37, 0
      %p415 = por %p413, %p414
      %s417 = sadd.s32 %s416, 1
      %p420 = scmp.eq.s32.totalorder %s31, 4
      %p421 = scmp.ne.s32.totalorder %s416, %s418
      %p422 = scmp.eq.s32.totalorder %s31, 0
      %p423 = por %p421, %p422
      %p424 = scmp.ne.s32.totalorder %s416, %s418
      %p425 = scmp.eq.s32.totalorder %s36, 4
      %p426 = por %p424, %p425
      %p427 = scmp.ne.s32.totalorder %s418, %s419
      %p428 = scmp.eq.s32.totalorder %s36, 0
      %p429 = por %p427, %p428
      %p430 = scmp.ne.s32.totalorder %s418, %s419
      %p431 = scmp.eq.s32.totalorder %s37, 4
      %p432 = por %p430, %p431
      %p434 = scmp.ne.s32.totalorder %s419, %s433
      %p435 = scmp.eq.s32.totalorder %s37, 0
      %p436 = por %p434, %p435
      %s437 = ssub.s32 %s31, %s38
      %p438 = scmp.eq.s32.totalorder %s437, 0
      %s440 = sadd.s32 %s439, 1
      %s441 = scalar_select %p438, %s439, %s440
      %p444 = pneg %p438
      %p445 = scmp.eq.s32.totalorder %s31, 4
      %p446 = por %p444, %p445
      %p447 = scmp.ne.s32.totalorder %s439, %s442
      %p448 = scmp.eq.s32.totalorder %s31, 0
      %p449 = por %p447, %p448
      %p450 = scmp.ne.s32.totalorder %s439, %s442
      %p451 = scmp.eq.s32.totalorder %s36, 4
      %p452 = por %p450, %p451
      %p453 = scmp.ne.s32.totalorder %s442, %s443
      %p454 = scmp.eq.s32.totalorder %s36, 0
      %p455 = por %p453, %p454
      %p456 = scmp.ne.s32.totalorder %s442, %s443
      %p457 = scmp.eq.s32.totalorder %s37, 4
      %p458 = por %p456, %p457
      %p460 = scmp.ne.s32.totalorder %s443, %s459
      %p461 = scmp.eq.s32.totalorder %s37, 0
      %p462 = por %p460, %p461
      %p463 = scmp.le.s32.totalorder 1, %s31
      %p464 = scmp.lt.s32.totalorder %s31, 6
      %p465 = pnand %p463, %p464
      %p466 = pneg %p465
      // Predicated region
      $region9: #{tpu_custom_call.1} parent=5 // pred_check
        _
      $region10: #{tpu_custom_call.1} parent=5 // pred_check_branch
        %468 = sbr.rel (%p465) target = $region12
      $region11: #{tpu_custom_call.1} parent=5 // pred_region
        %s469 = ssub.s32 %s31, 1
        // Predicated region
        $region13: #{tpu_custom_call.1} parent=11 // pred_check
          %p470 = pneg %p156
        $region14: #{tpu_custom_call.1} parent=11 // pred_check_branch
          %472 = sbr.rel (%p470) target = $region16
        $region15: #{tpu_custom_call.1} parent=11 // pred_region
          _
        $region16: #{tpu_custom_call.1} parent=11 // pred_fallthru
          _
        // Predicated region
        $region17: #{tpu_custom_call.1} parent=11 // pred_check
          %p473 = pneg %p177
        $region18: #{tpu_custom_call.1} parent=11 // pred_check_branch
          %475 = sbr.rel (%p473) target = $region20
        $region19: #{tpu_custom_call.1} parent=11 // pred_region
          _
        $region20: #{tpu_custom_call.1} parent=11 // pred_fallthru
          _
        // Predicated region
        $region21: #{tpu_custom_call.1} parent=11 // pred_check
          %p476 = pneg %p198
        $region22: #{tpu_custom_call.1} parent=11 // pred_check_branch
          %478 = sbr.rel (%p476) target = $region24
        $region23: #{tpu_custom_call.1} parent=11 // pred_region
          _
        $region24: #{tpu_custom_call.1} parent=11 // pred_fallthru
          _
        // Predicated region
        $region25: #{tpu_custom_call.1} parent=11 // pred_check
          %p479 = pneg %p219
        $region26: #{tpu_custom_call.1} parent=11 // pred_check_branch
          %481 = sbr.rel (%p479) target = $region28
        $region27: #{tpu_custom_call.1} parent=11 // pred_region
          _
        $region28: #{tpu_custom_call.1} parent=11 // pred_fallthru
          _
        // Predicated region
        $region29: #{tpu_custom_call.1} parent=11 // pred_check
          %p482 = pneg %p240
        $region30: #{tpu_custom_call.1} parent=11 // pred_check_branch
          %484 = sbr.rel (%p482) target = $region32
        $region31: #{tpu_custom_call.1} parent=11 // pred_region
          _
        $region32: #{tpu_custom_call.1} parent=11 // pred_fallthru
          _
        // Predicated region
        $region33: #{tpu_custom_call.1} parent=11 // pred_check
          %p485 = pneg %p261
        $region34: #{tpu_custom_call.1} parent=11 // pred_check_branch
          %487 = sbr.rel (%p485) target = $region36
        $region35: #{tpu_custom_call.1} parent=11 // pred_region
          _
        $region36: #{tpu_custom_call.1} parent=11 // pred_fallthru
          _
        // Predicated region
        $region37: #{tpu_custom_call.1} parent=11 // pred_check
          %p488 = pneg %p282
        $region38: #{tpu_custom_call.1} parent=11 // pred_check_branch
          %490 = sbr.rel (%p488) target = $region40
        $region39: #{tpu_custom_call.1} parent=11 // pred_region
          _
        $region40: #{tpu_custom_call.1} parent=11 // pred_fallthru
          _
        // Predicated region
        $region41: #{tpu_custom_call.1} parent=11 // pred_check
          %p491 = pneg %p303
        $region42: #{tpu_custom_call.1} parent=11 // pred_check_branch
          %493 = sbr.rel (%p491) target = $region44
        $region43: #{tpu_custom_call.1} parent=11 // pred_region
          _
        $region44: #{tpu_custom_call.1} parent=11 // pred_fallthru
          _
        // Predicated region
        $region45: #{tpu_custom_call.1} parent=11 // pred_check
          %p494 = pneg %p324
        $region46: #{tpu_custom_call.1} parent=11 // pred_check_branch
          %496 = sbr.rel (%p494) target = $region48
        $region47: #{tpu_custom_call.1} parent=11 // pred_region
          _
        $region48: #{tpu_custom_call.1} parent=11 // pred_fallthru
          _
        // Predicated region
        $region49: #{tpu_custom_call.1} parent=11 // pred_check
          %p497 = pneg %p345
        $region50: #{tpu_custom_call.1} parent=11 // pred_check_branch
          %499 = sbr.rel (%p497) target = $region52
        $region51: #{tpu_custom_call.1} parent=11 // pred_region
          _
        $region52: #{tpu_custom_call.1} parent=11 // pred_fallthru
          _
        // Predicated region
        $region53: #{tpu_custom_call.1} parent=11 // pred_check
          %p500 = pneg %p366
        $region54: #{tpu_custom_call.1} parent=11 // pred_check_branch
          %502 = sbr.rel (%p500) target = $region56
        $region55: #{tpu_custom_call.1} parent=11 // pred_region
          _
        $region56: #{tpu_custom_call.1} parent=11 // pred_fallthru
          _
        // Predicated region
        $region57: #{tpu_custom_call.1} parent=11 // pred_check
          %p503 = pneg %p387
        $region58: #{tpu_custom_call.1} parent=11 // pred_check_branch
          %505 = sbr.rel (%p503) target = $region60
        $region59: #{tpu_custom_call.1} parent=11 // pred_region
          _
        $region60: #{tpu_custom_call.1} parent=11 // pred_fallthru
          _
        // Predicated region
        $region61: #{tpu_custom_call.1} parent=11 // pred_check
          %p506 = pneg %p408
        $region62: #{tpu_custom_call.1} parent=11 // pred_check_branch
          %508 = sbr.rel (%p506) target = $region64
        $region63: #{tpu_custom_call.1} parent=11 // pred_region
          _
        $region64: #{tpu_custom_call.1} parent=11 // pred_fallthru
          _
        // Predicated region
        $region65: #{tpu_custom_call.1} parent=11 // pred_check
          %p509 = pneg %p429
        $region66: #{tpu_custom_call.1} parent=11 // pred_check_branch
          %511 = sbr.rel (%p509) target = $region68
        $region67: #{tpu_custom_call.1} parent=11 // pred_region
          _
        $region68: #{tpu_custom_call.1} parent=11 // pred_fallthru
          _
      $region12: #{tpu_custom_call.1} parent=5 // pred_fallthru
        _
      %p512 = scmp.lt.s32.totalorder %s31, 5
      // Predicated region
      $region69: #{tpu_custom_call.1} parent=5 // pred_check
        %p513 = pneg %p512
      $region70: #{tpu_custom_call.1} parent=5 // pred_check_branch
        %515 = sbr.rel (%p513) target = $region72
      $region71: #{tpu_custom_call.1} parent=5 // pred_region
        // Predicated region
        $region73: #{tpu_custom_call.1} parent=71 // pred_check
          %p516 = pneg %p51
        $region74: #{tpu_custom_call.1} parent=71 // pred_check_branch
          %518 = sbr.rel (%p516) target = $region76
        $region75: #{tpu_custom_call.1} parent=71 // pred_region
          %s519 = sand.u32 %s41, 1
          %s520 = sand.u32 %s41, 1
          %s521 = smul.addr %s520, 16
          %s522 = scalar_lea.vmem [#allocation4], %s521
          %s523 = smul.addr %s31, 4
          %s524 = scalar_lea.vmem %s0, %s523
          // Predicated region
          $region77: #{tpu_custom_call.1} parent=75 // pred_check
            _
          $region78: #{tpu_custom_call.1} parent=75 // pred_check_branch
            %526 = sbr.rel (0) target = $region80
          $region79: #{tpu_custom_call.1} parent=75 // pred_region
            // Predicated region
            $region81: #{tpu_custom_call.1} parent=79 // pred_check
              _
            $region82: #{tpu_custom_call.1} parent=79 // pred_check_branch
              %528 = sbr.rel target = $region84
            $region83: #{tpu_custom_call.1} parent=79 // pred_region
              // Predicated region
              $region96: #{tpu_custom_call.1} parent=83 // pred_check
                _
              $region97: #{tpu_custom_call.1} parent=83 // pred_check_branch
                %549 = sbr.rel (0) target = $region99
              $region98: #{tpu_custom_call.1} parent=83 // pred_region
                loop: start=0, step=1, limit=1
                $region100: #{tpu_custom_call.1} parent=98 // loop_pre_header
                  _
                $region101: #{tpu_custom_call.1} parent=98 // loop_header
                  %s551 = sphi 0, %s555
                  %p552 = scmp.ge.s32.totalorder %s551, 1
                  %s556 = sphi %s524, %s524
                  %s557 = sphi %s522, %s522
                $region102: #{tpu_custom_call.1} parent=98 // loop_header_branch
                  %554 = sbr.rel (%p552) target = $region106
                $region103: #{tpu_custom_call.1} parent=98 // loop_body
                  _
                $region104: #{tpu_custom_call.1} parent=98 // loop_footer
                  %s555 = sadd.s32 1, %s551
                $region105: #{tpu_custom_call.1} parent=98 // loop_footer_branch
                  %550 = sbr.rel target = $region101
                $region106: #{tpu_custom_call.1} parent=98 // loop_exit
                  _
                loop: start=0, step=1, limit=1
                $region107: #{tpu_custom_call.1} parent=98 // loop_pre_header
                  _
                $region108: #{tpu_custom_call.1} parent=98 // loop_header
                  %s560 = sphi 0, %s564
                  %p561 = scmp.ge.s32.totalorder %s560, 1
                  %s565 = sphi %s524, %s524
                  %s566 = sphi %s522, %s522
                $region109: #{tpu_custom_call.1} parent=98 // loop_header_branch
                  %563 = sbr.rel (%p561) target = $region113
                $region110: #{tpu_custom_call.1} parent=98 // loop_body
                  %v567 = vld [vmem:[%s565] sm:$0xf]
                  %568 = vst [vmem:[%s566] sm:$0xf] %v567
                  %v569 = vld [vmem:[%s565 + $0x14] sm:$0xf]
                  %570 = vst [vmem:[%s566 + $0x4] sm:$0xf] %v569
                  %v571 = vld [vmem:[%s565 + $0x28] sm:$0xf]
                  %572 = vst [vmem:[%s566 + $0x8] sm:$0xf] %v571
                  %v573 = vld [vmem:[%s565 + $0x3c] sm:$0xf]
                  %574 = vst [vmem:[%s566 + $0xc] sm:$0xf] %v573
                $region111: #{tpu_custom_call.1} parent=98 // loop_footer
                  %s564 = sadd.s32 1, %s560
                $region112: #{tpu_custom_call.1} parent=98 // loop_footer_branch
                  %559 = sbr.rel target = $region108
                $region113: #{tpu_custom_call.1} parent=98 // loop_exit
                  _
              $region99: #{tpu_custom_call.1} parent=83 // pred_fallthru
                _
            $region84: #{tpu_custom_call.1} parent=79 // pred_fallthru
              _
            // Predicated region
            $region85: #{tpu_custom_call.1} parent=79 // pred_check
              _
            $region86: #{tpu_custom_call.1} parent=79 // pred_check_branch
              %530 = sbr.rel (0) target = $region88
            $region87: #{tpu_custom_call.1} parent=79 // pred_region
              loop: start=0, step=1, limit=1
              $region89: #{tpu_custom_call.1} parent=87 // loop_pre_header
                _
              $region90: #{tpu_custom_call.1} parent=87 // loop_header
                %s533 = sphi 0, %s537
                %p534 = scmp.ge.s32.totalorder %s533, 1
                %s538 = sphi %s524, %s524
                %s539 = sphi %s522, %s522
              $region91: #{tpu_custom_call.1} parent=87 // loop_header_branch
                %536 = sbr.rel (%p534) target = $region95
              $region92: #{tpu_custom_call.1} parent=87 // loop_body
                %v540 = vld [vmem:[%s538] sm:$0xf]
                %541 = vst [vmem:[%s539] sm:$0xf] %v540
                %v542 = vld [vmem:[%s538 + $0x14] sm:$0xf]
                %543 = vst [vmem:[%s539 + $0x4] sm:$0xf] %v542
                %v544 = vld [vmem:[%s538 + $0x28] sm:$0xf]
                %545 = vst [vmem:[%s539 + $0x8] sm:$0xf] %v544
                %v546 = vld [vmem:[%s538 + $0x3c] sm:$0xf]
                %547 = vst [vmem:[%s539 + $0xc] sm:$0xf] %v546
              $region93: #{tpu_custom_call.1} parent=87 // loop_footer
                %s537 = sadd.s32 1, %s533
              $region94: #{tpu_custom_call.1} parent=87 // loop_footer_branch
                %532 = sbr.rel target = $region90
              $region95: #{tpu_custom_call.1} parent=87 // loop_exit
                _
            $region88: #{tpu_custom_call.1} parent=79 // pred_fallthru
              _
          $region80: #{tpu_custom_call.1} parent=75 // pred_fallthru
            _
          %575 = vnop
        $region76: #{tpu_custom_call.1} parent=71 // pred_fallthru
          _
        // Predicated region
        $region114: #{tpu_custom_call.1} parent=71 // pred_check
          %p576 = pneg %p77
        $region115: #{tpu_custom_call.1} parent=71 // pred_check_branch
          %578 = sbr.rel (%p576) target = $region117
        $region116: #{tpu_custom_call.1} parent=71 // pred_region
          %s579 = sand.u32 %s67, 1
          %s580 = sand.u32 %s67, 1
          %s581 = smul.addr %s580, 16
          %s582 = scalar_lea.vmem [#allocation5], %s581
          %s583 = smul.addr %s31, 4
          %s584 = scalar_lea.vmem %s1, %s583
          // Predicated region
          $region118: #{tpu_custom_call.1} parent=116 // pred_check
            _
          $region119: #{tpu_custom_call.1} parent=116 // pred_check_branch
            %586 = sbr.rel (0) target = $region121
          $region120: #{tpu_custom_call.1} parent=116 // pred_region
            // Predicated region
            $region122: #{tpu_custom_call.1} parent=120 // pred_check
              _
            $region123: #{tpu_custom_call.1} parent=120 // pred_check_branch
              %588 = sbr.rel target = $region125
            $region124: #{tpu_custom_call.1} parent=120 // pred_region
              // Predicated region
              $region137: #{tpu_custom_call.1} parent=124 // pred_check
                _
              $region138: #{tpu_custom_call.1} parent=124 // pred_check_branch
                %609 = sbr.rel (0) target = $region140
              $region139: #{tpu_custom_call.1} parent=124 // pred_region
                loop: start=0, step=1, limit=1
                $region141: #{tpu_custom_call.1} parent=139 // loop_pre_header
                  _
                $region142: #{tpu_custom_call.1} parent=139 // loop_header
                  %s611 = sphi 0, %s615
                  %p612 = scmp.ge.s32.totalorder %s611, 1
                  %s616 = sphi %s584, %s584
                  %s617 = sphi %s582, %s582
                $region143: #{tpu_custom_call.1} parent=139 // loop_header_branch
                  %614 = sbr.rel (%p612) target = $region147
                $region144: #{tpu_custom_call.1} parent=139 // loop_body
                  _
                $region145: #{tpu_custom_call.1} parent=139 // loop_footer
                  %s615 = sadd.s32 1, %s611
                $region146: #{tpu_custom_call.1} parent=139 // loop_footer_branch
                  %610 = sbr.rel target = $region142
                $region147: #{tpu_custom_call.1} parent=139 // loop_exit
                  _
                loop: start=0, step=1, limit=1
                $region148: #{tpu_custom_call.1} parent=139 // loop_pre_header
                  _
                $region149: #{tpu_custom_call.1} parent=139 // loop_header
                  %s620 = sphi 0, %s624
                  %p621 = scmp.ge.s32.totalorder %s620, 1
                  %s625 = sphi %s584, %s584
                  %s626 = sphi %s582, %s582
                $region150: #{tpu_custom_call.1} parent=139 // loop_header_branch
                  %623 = sbr.rel (%p621) target = $region154
                $region151: #{tpu_custom_call.1} parent=139 // loop_body
                  %v627 = vld [vmem:[%s625] sm:$0xf]
                  %628 = vst [vmem:[%s626] sm:$0xf] %v627
                  %v629 = vld [vmem:[%s625 + $0x14] sm:$0xf]
                  %630 = vst [vmem:[%s626 + $0x4] sm:$0xf] %v629
                  %v631 = vld [vmem:[%s625 + $0x28] sm:$0xf]
                  %632 = vst [vmem:[%s626 + $0x8] sm:$0xf] %v631
                  %v633 = vld [vmem:[%s625 + $0x3c] sm:$0xf]
                  %634 = vst [vmem:[%s626 + $0xc] sm:$0xf] %v633
                $region152: #{tpu_custom_call.1} parent=139 // loop_footer
                  %s624 = sadd.s32 1, %s620
                $region153: #{tpu_custom_call.1} parent=139 // loop_footer_branch
                  %619 = sbr.rel target = $region149
                $region154: #{tpu_custom_call.1} parent=139 // loop_exit
                  _
              $region140: #{tpu_custom_call.1} parent=124 // pred_fallthru
                _
            $region125: #{tpu_custom_call.1} parent=120 // pred_fallthru
              _
            // Predicated region
            $region126: #{tpu_custom_call.1} parent=120 // pred_check
              _
            $region127: #{tpu_custom_call.1} parent=120 // pred_check_branch
              %590 = sbr.rel (0) target = $region129
            $region128: #{tpu_custom_call.1} parent=120 // pred_region
              loop: start=0, step=1, limit=1
              $region130: #{tpu_custom_call.1} parent=128 // loop_pre_header
                _
              $region131: #{tpu_custom_call.1} parent=128 // loop_header
                %s593 = sphi 0, %s597
                %p594 = scmp.ge.s32.totalorder %s593, 1
                %s598 = sphi %s584, %s584
                %s599 = sphi %s582, %s582
              $region132: #{tpu_custom_call.1} parent=128 // loop_header_branch
                %596 = sbr.rel (%p594) target = $region136
              $region133: #{tpu_custom_call.1} parent=128 // loop_body
                %v600 = vld [vmem:[%s598] sm:$0xf]
                %601 = vst [vmem:[%s599] sm:$0xf] %v600
                %v602 = vld [vmem:[%s598 + $0x14] sm:$0xf]
                %603 = vst [vmem:[%s599 + $0x4] sm:$0xf] %v602
                %v604 = vld [vmem:[%s598 + $0x28] sm:$0xf]
                %605 = vst [vmem:[%s599 + $0x8] sm:$0xf] %v604
                %v606 = vld [vmem:[%s598 + $0x3c] sm:$0xf]
                %607 = vst [vmem:[%s599 + $0xc] sm:$0xf] %v606
              $region134: #{tpu_custom_call.1} parent=128 // loop_footer
                %s597 = sadd.s32 1, %s593
              $region135: #{tpu_custom_call.1} parent=128 // loop_footer_branch
                %592 = sbr.rel target = $region131
              $region136: #{tpu_custom_call.1} parent=128 // loop_exit
                _
            $region129: #{tpu_custom_call.1} parent=120 // pred_fallthru
              _
          $region121: #{tpu_custom_call.1} parent=116 // pred_fallthru
            _
          %635 = vnop
        $region117: #{tpu_custom_call.1} parent=71 // pred_fallthru
          _
        // Predicated region
        $region155: #{tpu_custom_call.1} parent=71 // pred_check
          %p636 = pneg %p103
        $region156: #{tpu_custom_call.1} parent=71 // pred_check_branch
          %638 = sbr.rel (%p636) target = $region158
        $region157: #{tpu_custom_call.1} parent=71 // pred_region
          %p639 = scmp.lt.s32.totalorder %s31, 4
          %s640 = scalar_select %p639, %s31, 4
          %s641 = smul.addr %s640, 4
          %s642 = scalar_lea.vmem %s2, %s641
        $region158: #{tpu_custom_call.1} parent=71 // pred_fallthru
          _
        // Predicated region
        $region159: #{tpu_custom_call.1} parent=71 // pred_check
          %p643 = pneg %p129
        $region160: #{tpu_custom_call.1} parent=71 // pred_check_branch
          %645 = sbr.rel (%p643) target = $region162
        $region161: #{tpu_custom_call.1} parent=71 // pred_region
          %p646 = scmp.lt.s32.totalorder %s31, 4
          %s647 = scalar_select %p646, %s31, 4
          %s648 = smul.addr %s647, 4
          %s649 = scalar_lea.vmem %s3, %s648
        $region162: #{tpu_custom_call.1} parent=71 // pred_fallthru
          _
      $region72: #{tpu_custom_call.1} parent=5 // pred_fallthru
        _
      %p650 = scmp.le.s32.totalorder 1, %s31
      %p651 = scmp.lt.s32.totalorder %s31, 6
      %p652 = pnand %p650, %p651
      %p653 = pneg %p652
      // Predicated region
      $region163: #{tpu_custom_call.1} parent=5 // pred_check
        _
      $region164: #{tpu_custom_call.1} parent=5 // pred_check_branch
        %655 = sbr.rel (%p652) target = $region166
      $region165: #{tpu_custom_call.1} parent=5 // pred_region
        %s656 = ssub.s32 %s31, 1
        %s657 = sand.u32 %s44, 1
        %s658 = sand.u32 %s44, 1
        %s659 = smul.addr %s658, 16
        %s660 = scalar_lea.vmem [#allocation4], %s659
        // Predicated region
        $region167: #{tpu_custom_call.1} parent=165 // pred_check
          %p661 = pneg %p57
        $region168: #{tpu_custom_call.1} parent=165 // pred_check_branch
          %663 = sbr.rel (%p661) target = $region170
        $region169: #{tpu_custom_call.1} parent=165 // pred_region
          _
        $region170: #{tpu_custom_call.1} parent=165 // pred_fallthru
          _
        %s664 = sand.u32 %s70, 1
        %s665 = sand.u32 %s70, 1
        %s666 = smul.addr %s665, 16
        %s667 = scalar_lea.vmem [#allocation5], %s666
        // Predicated region
        $region171: #{tpu_custom_call.1} parent=165 // pred_check
          %p668 = pneg %p83
        $region172: #{tpu_custom_call.1} parent=165 // pred_check_branch
          %670 = sbr.rel (%p668) target = $region174
        $region173: #{tpu_custom_call.1} parent=165 // pred_region
          _
        $region174: #{tpu_custom_call.1} parent=165 // pred_fallthru
          _
        %s671 = sand.u32 %s44, 1
        %s672 = sand.u32 %s44, 1
        %s673 = smul.addr %s672, 16
        %s674 = scalar_lea.vmem [#allocation4], %s673
        %p675 = pneg %p57
        %p676 = pneg %p54
        %s677 = sand.u32 %s70, 1
        %s678 = sand.u32 %s70, 1
        %s679 = smul.addr %s678, 16
        %s680 = scalar_lea.vmem [#allocation5], %s679
        %p681 = pneg %p83
        %p682 = pneg %p80
        %p683 = scmp.lt.s32.totalorder %s36, 4
        %s684 = scalar_select %p683, %s36, 4
        %s685 = smul.addr %s684, 4
        %s686 = scalar_lea.vmem %s2, %s685
        %p687 = pneg %p109
        %p688 = pneg %p106
        %p689 = scmp.lt.s32.totalorder %s36, 4
        %s690 = scalar_select %p689, %s36, 4
        %s691 = smul.addr %s690, 4
        %s692 = scalar_lea.vmem %s3, %s691
        %p693 = pneg %p135
        %p694 = pneg %p132
        %p695 = pneg %p156
        %p696 = pneg %p153
        %p697 = pneg %p177
        %p698 = pneg %p174
        %p699 = pneg %p198
        %p700 = pneg %p195
        %p701 = pneg %p219
        %p702 = pneg %p216
        %p703 = pneg %p240
        %p704 = pneg %p237
        %p705 = pneg %p261
        %p706 = pneg %p258
        %p707 = pneg %p282
        %p708 = pneg %p279
        %p709 = pneg %p303
        %p710 = pneg %p300
        %p711 = pneg %p324
        %p712 = pneg %p321
        %p713 = pneg %p345
        %p714 = pneg %p342
        %p715 = pneg %p366
        %p716 = pneg %p363
        %p717 = pneg %p387
        %p718 = pneg %p384
        %p719 = pneg %p408
        %p720 = pneg %p405
        %p721 = pneg %p429
        %p722 = pneg %p426
        %p723 = pneg %p455
        %p724 = pneg %p452
        %s725 = sand.u32 %s442, 1
        %s726 = scalar_lea.sflag [#allocation7], %s725
        %s727 = sand.u32 %s442, 1
        %s728 = scalar_lea.vmem [#allocation6], %s727
        %p729 = scmp.lt.s32.totalorder %s36, 4
        %s730 = scalar_select %p729, %s36, 4
        %s731 = smul.addr %s730, 4
        %s732 = scalar_lea.vmem %s2, %s731
        %p733 = scmp.lt.s32.totalorder %s36, 4
        %s734 = scalar_select %p733, %s36, 4
        %s735 = smul.addr %s734, 4
        %s736 = scalar_lea.vmem %s3, %s735
        %v737 = vld [vmem:[%s736] sm:$0x7]
        %v738 = vld [vmem:[%s732] sm:$0x7]
        %v739 = vsub.f32 %v737, %v738
        %v740 = vmul.f32 %v739, %v739
        %v742 = vrot.slane %v740, 1
        %v744 = vadd.f32 %v740, %v742
        %v745 = vrot.slane %v740, 2
        %v747 = vadd.f32 %v744, %v745
        %v748 = vrsqrt.pop %v747
        %v749 = vmul.f32 %v747, %v748
        %vm750 = vcmp.eq.f32.partialorder %v747, inf
        %v751 = vsel %vm750, %v747, %v749
        %vm752 = vcmp.eq.f32.partialorder %v747, 0.0
        %v753 = vand.u32 %v747, 2147483648
        %v754 = vsel %vm752, %v753, %v751
        %v755 = vadd.f32 %v754, 1e-08
        %v756 = vrcp.pop %v755
        %v757 = vlaneseq
        %v758 = vshrl.u32 %v757, 7
        %v759 = vsub.s32 0, %v758
        %v760 = vrot.slane %v756, %v759
        %v761 = vmul.f32 %v739, %v760
        %v762 = vld [vmem:[%s5] sm:$0xff]
        %v763 = vld [vmem:[%s5 + $0x8] sm:$0xff]
        %v764 = vld [vmem:[%s6] sm:$0xff]
        %v765 = vld [vmem:[%s6 + $0x8] sm:$0xff]
        %767 = vset.pattern.permute.xlu0 0
        %768 = vperm.xlu0 %767, %v762
        %v769 = vpop.permute.xlu0 %768
        %772 = vset.pattern.permute.xlu0 0
        %773 = vperm.xlu0 %772, %v763
        %v774 = vpop.permute.xlu0 %773
        %v776 = vlaneseq
        %v777 = vshrl.u32 %v776, 7
        %v778 = vsub.s32 0, %v777
        %v779 = vrot.slane %v754, %v778
        %v780 = vmul.f32 %v769, %v779
        %v781 = vmul.f32 %v774, %v779
        %783 = vset.pattern.permute.xlu0 0
        %784 = vperm.xlu0 %783, %v764
        %v785 = vpop.permute.xlu0 %784
        %788 = vset.pattern.permute.xlu0 0
        %789 = vperm.xlu0 %788, %v765
        %v790 = vpop.permute.xlu0 %789
        %v792 = vadd.f32 %v785, %v780
        %v793 = vadd.f32 %v790, %v781
        %794 = vset.pattern.permute.xlu0 1
        %795 = vperm.xlu0 %794, %v762
        %v796 = vpop.permute.xlu0 %795
        %798 = vset.pattern.permute.xlu0 1
        %799 = vperm.xlu0 %798, %v763
        %v800 = vpop.permute.xlu0 %799
        %v802 = vlaneseq
        %v803 = vshrl.u32 %v802, 7
        %v804 = vsub.s32 0, %v803
        %v805 = vrot.slane %v761, %v804
        %v806 = vmul.f32 %v796, %v805
        %v807 = vmul.f32 %v800, %v805
        %v808 = vadd.f32 %v792, %v806
        %v809 = vadd.f32 %v793, %v807
        %810 = vset.pattern.permute.xlu0 2
        %811 = vperm.xlu0 %810, %v762
        %v812 = vpop.permute.xlu0 %811
        %814 = vset.pattern.permute.xlu0 2
        %815 = vperm.xlu0 %814, %v763
        %v816 = vpop.permute.xlu0 %815
        %v818 = vlaneseq
        %v819 = vshrl.u32 %v818, 7
        %v820 = vsub.s32 1, %v819
        %v821 = vrot.slane %v761, %v820
        %v822 = vmul.f32 %v812, %v821
        %v823 = vmul.f32 %v816, %v821
        %v824 = vadd.f32 %v808, %v822
        %v825 = vadd.f32 %v809, %v823
        %826 = vset.pattern.permute.xlu0 3
        %827 = vperm.xlu0 %826, %v762
        %v828 = vpop.permute.xlu0 %827
        %830 = vset.pattern.permute.xlu0 3
        %831 = vperm.xlu0 %830, %v763
        %v832 = vpop.permute.xlu0 %831
        %v834 = vlaneseq
        %v835 = vshrl.u32 %v834, 7
        %v836 = vsub.s32 2, %v835
        %v837 = vrot.slane %v761, %v836
        %v838 = vmul.f32 %v828, %v837
        %v839 = vmul.f32 %v832, %v837
        %v840 = vadd.f32 %v824, %v838
        %v841 = vadd.f32 %v825, %v839
        %v842 = vmax.f32 %v840, 0.0
        %v843 = vmax.f32 %v841, 0.0
        %v844 = vld [vmem:[%s7] sm:$0xff]
        %v845 = vld [vmem:[%s7 + $0x8] sm:$0xff]
        %v846 = vld [vmem:[%s7 + $0x10] sm:$0xff]
        %v847 = vld [vmem:[%s7 + $0x18] sm:$0xff]
        %v848 = vld [vmem:[%s8] sm:$0xff]
        %v849 = vld [vmem:[%s8 + $0x8] sm:$0xff]
        %v850 = vld [vmem:[%s8 + $0x10] sm:$0xff]
        %v851 = vld [vmem:[%s8 + $0x18] sm:$0xff]
        %853 = vset.pattern.permute.xlu0 0
        %854 = vperm.xlu0 %853, %v848
        %v855 = vpop.permute.xlu0 %854
        %858 = vset.pattern.permute.xlu0 0
        %859 = vperm.xlu0 %858, %v849
        %v860 = vpop.permute.xlu0 %859
        %863 = vset.pattern.permute.xlu0 0
        %864 = vperm.xlu0 %863, %v850
        %v865 = vpop.permute.xlu0 %864
        %868 = vset.pattern.permute.xlu0 0
        %869 = vperm.xlu0 %868, %v851
        %v870 = vpop.permute.xlu0 %869
        %vm872 = vcmask 130048
        %v874 = vsel %vm872, %v844, 0
        %v877 = vsel %vm872, %v845, 0
        %v880 = vsel %vm872, %v846, 0
        %v883 = vsel %vm872, %v847, 0
        %885 = vmatprep.subr.mxu0 0.0
        %886 = vmatpush1.msra.mxu0 %v842
        %887 = vmatprep.subr.mxu0 0.0
        %888 = vmatpush1.msra.mxu0 %v843
        %889 = vmatprep.subr.mxu0 0.0
        %890 = vmatpush1.msra.mxu0 0.0
        %891 = vmatprep.subr.mxu0 0.0
        %892 = vmatpush1.msra.mxu0 0.0
        %893 = vmatprep.subr.mxu0 0.0
        %894 = vmatpush1.msra.mxu0 0.0
        %895 = vmatprep.subr.mxu0 0.0
        %896 = vmatpush1.msra.mxu0 0.0
        %897 = vmatprep.subr.mxu0 0.0
        %898 = vmatpush1.msra.mxu0 0.0
        %899 = vmatprep.subr.mxu0 0.0
        %900 = vmatpush1.msra.mxu0 0.0
        %901 = vmatprep.subr.mxu0 0.0
        %902 = vmatpush1.msra.mxu0 0.0
        %903 = vmatprep.subr.mxu0 0.0
        %904 = vmatpush1.msra.mxu0 0.0
        %905 = vmatprep.subr.mxu0 0.0
        %906 = vmatpush1.msra.mxu0 0.0
        %907 = vmatprep.subr.mxu0 0.0
        %908 = vmatpush1.msra.mxu0 0.0
        %909 = vmatprep.subr.mxu0 0.0
        %910 = vmatpush1.msra.mxu0 0.0
        %911 = vmatprep.subr.mxu0 0.0
        %912 = vmatpush1.msra.mxu0 0.0
        %913 = vmatprep.subr.mxu0 0.0
        %914 = vmatpush1.msra.mxu0 0.0
        %915 = vmatprep.subr.mxu0 0.0
        %916 = vmatpush1.msra.mxu0 0.0
        %917 = vmatprep.subr.mxu0 0.0
        %918 = vmatpush1.msra.mxu0 0.0
        %919 = vmatprep.subr.mxu0 0.0
        %920 = vmatpush1.msra.mxu0 0.0
        %921 = vmatprep.subr.mxu0 0.0
        %922 = vmatpush1.msra.mxu0 0.0
        %923 = vmatprep.subr.mxu0 0.0
        %924 = vmatpush1.msra.mxu0 0.0
        %925 = vmatprep.subr.mxu0 0.0
        %926 = vmatpush1.msra.mxu0 0.0
        %927 = vmatprep.subr.mxu0 0.0
        %928 = vmatpush1.msra.mxu0 0.0
        %929 = vmatprep.subr.mxu0 0.0
        %930 = vmatpush1.msra.mxu0 0.0
        %931 = vmatprep.subr.mxu0 0.0
        %932 = vmatpush1.msra.mxu0 0.0
        %933 = vmatprep.subr.mxu0 0.0
        %934 = vmatpush1.msra.mxu0 0.0
        %935 = vmatprep.subr.mxu0 0.0
        %936 = vmatpush1.msra.mxu0 0.0
        %937 = vmatprep.subr.mxu0 0.0
        %938 = vmatpush1.msra.mxu0 0.0
        %939 = vmatprep.subr.mxu0 0.0
        %940 = vmatpush1.msra.mxu0 0.0
        %941 = vmatprep.subr.mxu0 0.0
        %942 = vmatpush1.msra.mxu0 0.0
        %943 = vmatprep.subr.mxu0 0.0
        %944 = vmatpush1.msra.mxu0 0.0
        %945 = vmatprep.subr.mxu0 0.0
        %946 = vmatpush1.msra.mxu0 0.0
        %947 = vmatprep.subr.mxu0 0.0
        %948 = vmatpush1.msra.mxu0 0.0
        %949 = vmatprep.mubr.f32.mxu0 0.0
        %950 = vmatmul.mubr.f32.gmra.mrb[0].mxu0 %v874
        %v951 = vpop.f32.mrb[0].mxu0
        %v952 = vadd.f32 %v855, %v951
        %v953 = vpop.f32.mrb[0].mxu0
        %954 = vmatprep.mubr.f32.mxu0 0.0
        %955 = vmatmul.mubr.f32.gmra.mrb[0].mxu0 %v877
        %v956 = vpop.f32.mrb[0].mxu0
        %v957 = vadd.f32 %v860, %v956
        %v958 = vpop.f32.mrb[0].mxu0
        %959 = vmatprep.mubr.f32.mxu0 0.0
        %960 = vmatmul.mubr.f32.gmra.mrb[0].mxu0 %v880
        %v961 = vpop.f32.mrb[0].mxu0
        %v962 = vadd.f32 %v865, %v961
        %v963 = vpop.f32.mrb[0].mxu0
        %964 = vmatprep.mubr.f32.mxu0 0.0
        %965 = vmatmul.mubr.f32.gmra.mrb[0].mxu0 %v883
        %v966 = vpop.f32.mrb[0].mxu0
        %v967 = vadd.f32 %v870, %v966
        %v968 = vpop.f32.mrb[0].mxu0
        %969 = vdwg.mxu0
        %v970 = vmax.f32 %v952, 0.0
        %v971 = vmax.f32 %v957, 0.0
        %v972 = vmax.f32 %v962, 0.0
        %v973 = vmax.f32 %v967, 0.0
        %v974 = vld [vmem:[%s9] sm:$0xff]
        %v975 = vld [vmem:[%s9 + $0x8] sm:$0xff]
        %v976 = vld [vmem:[%s10] sm:$0xff]
        %v977 = vld [vmem:[%s10 + $0x8] sm:$0xff]
        %979 = vset.pattern.permute.xlu0 0
        %980 = vperm.xlu0 %979, %v976
        %v981 = vpop.permute.xlu0 %980
        %984 = vset.pattern.permute.xlu0 0
        %985 = vperm.xlu0 %984, %v977
        %v986 = vpop.permute.xlu0 %985
        %vm988 = vcmask 261120
        %v990 = vsel %vm988, %v974, 0
        %v993 = vsel %vm988, %v975, 0
        %995 = vmatprep.subr.mxu0 0.0
        %996 = vmatpush1.msra.mxu0 %v970
        %997 = vmatprep.subr.mxu0 0.0
        %998 = vmatpush1.msra.mxu0 %v971
        %999 = vmatprep.subr.mxu0 0.0
        %1000 = vmatpush1.msra.mxu0 %v972
        %1001 = vmatprep.subr.mxu0 0.0
        %1002 = vmatpush1.msra.mxu0 %v973
        %1003 = vmatprep.subr.mxu0 0.0
        %1004 = vmatpush1.msra.mxu0 0.0
        %1005 = vmatprep.subr.mxu0 0.0
        %1006 = vmatpush1.msra.mxu0 0.0
        %1007 = vmatprep.subr.mxu0 0.0
        %1008 = vmatpush1.msra.mxu0 0.0
        %1009 = vmatprep.subr.mxu0 0.0
        %1010 = vmatpush1.msra.mxu0 0.0
        %1011 = vmatprep.subr.mxu0 0.0
        %1012 = vmatpush1.msra.mxu0 0.0
        %1013 = vmatprep.subr.mxu0 0.0
        %1014 = vmatpush1.msra.mxu0 0.0
        %1015 = vmatprep.subr.mxu0 0.0
        %1016 = vmatpush1.msra.mxu0 0.0
        %1017 = vmatprep.subr.mxu0 0.0
        %1018 = vmatpush1.msra.mxu0 0.0
        %1019 = vmatprep.subr.mxu0 0.0
        %1020 = vmatpush1.msra.mxu0 0.0
        %1021 = vmatprep.subr.mxu0 0.0
        %1022 = vmatpush1.msra.mxu0 0.0
        %1023 = vmatprep.subr.mxu0 0.0
        %1024 = vmatpush1.msra.mxu0 0.0
        %1025 = vmatprep.subr.mxu0 0.0
        %1026 = vmatpush1.msra.mxu0 0.0
        %1027 = vmatprep.subr.mxu0 0.0
        %1028 = vmatpush1.msra.mxu0 0.0
        %1029 = vmatprep.subr.mxu0 0.0
        %1030 = vmatpush1.msra.mxu0 0.0
        %1031 = vmatprep.subr.mxu0 0.0
        %1032 = vmatpush1.msra.mxu0 0.0
        %1033 = vmatprep.subr.mxu0 0.0
        %1034 = vmatpush1.msra.mxu0 0.0
        %1035 = vmatprep.subr.mxu0 0.0
        %1036 = vmatpush1.msra.mxu0 0.0
        %1037 = vmatprep.subr.mxu0 0.0
        %1038 = vmatpush1.msra.mxu0 0.0
        %1039 = vmatprep.subr.mxu0 0.0
        %1040 = vmatpush1.msra.mxu0 0.0
        %1041 = vmatprep.subr.mxu0 0.0
        %1042 = vmatpush1.msra.mxu0 0.0
        %1043 = vmatprep.subr.mxu0 0.0
        %1044 = vmatpush1.msra.mxu0 0.0
        %1045 = vmatprep.subr.mxu0 0.0
        %1046 = vmatpush1.msra.mxu0 0.0
        %1047 = vmatprep.subr.mxu0 0.0
        %1048 = vmatpush1.msra.mxu0 0.0
        %1049 = vmatprep.subr.mxu0 0.0
        %1050 = vmatpush1.msra.mxu0 0.0
        %1051 = vmatprep.subr.mxu0 0.0
        %1052 = vmatpush1.msra.mxu0 0.0
        %1053 = vmatprep.subr.mxu0 0.0
        %1054 = vmatpush1.msra.mxu0 0.0
        %1055 = vmatprep.subr.mxu0 0.0
        %1056 = vmatpush1.msra.mxu0 0.0
        %1057 = vmatprep.subr.mxu0 0.0
        %1058 = vmatpush1.msra.mxu0 0.0
        %1059 = vmatprep.mubr.f32.mxu0 0.0
        %1060 = vmatmul.mubr.f32.gmra.mrb[0].mxu0 %v990
        %v1061 = vpop.f32.mrb[0].mxu0
        %v1062 = vadd.f32 %v981, %v1061
        %v1063 = vpop.f32.mrb[0].mxu0
        %1064 = vmatprep.mubr.f32.mxu0 0.0
        %1065 = vmatmul.mubr.f32.gmra.mrb[0].mxu0 %v993
        %v1066 = vpop.f32.mrb[0].mxu0
        %v1067 = vadd.f32 %v986, %v1066
        %v1068 = vpop.f32.mrb[0].mxu0
        %1069 = vdwg.mxu0
        %v1070 = vmax.f32 %v1062, 0.0
        %v1071 = vmax.f32 %v1067, 0.0
        %v1072 = vld [vmem:[%s11] sm:$0x1]
        %v1073 = vld [vmem:[#allocation2] sm:$0x1]
        %1075 = vset.pattern.permute.xlu0 0
        %1076 = vperm.xlu0 %1075, %v1073
        %v1077 = vpop.permute.xlu0 %1076
        %v1079 = vlaneseq
        %v1080 = vshrl.u32 %v1079, 7
        %v1081 = vsub.s32 0, %v1080
        %v1082 = vrot.slane %v1077, %v1081
        %v1084 = vsel %vm872, %v1072, 0
        %1086 = vmatprep.subr.mxu0 0.0
        %1087 = vmatpush1.msra.mxu0 %v1070
        %1088 = vmatprep.subr.mxu0 0.0
        %1089 = vmatpush1.msra.mxu0 %v1071
        %1090 = vmatprep.subr.mxu0 0.0
        %1091 = vmatpush1.msra.mxu0 0.0
        %1092 = vmatprep.subr.mxu0 0.0
        %1093 = vmatpush1.msra.mxu0 0.0
        %1094 = vmatprep.subr.mxu0 0.0
        %1095 = vmatpush1.msra.mxu0 0.0
        %1096 = vmatprep.subr.mxu0 0.0
        %1097 = vmatpush1.msra.mxu0 0.0
        %1098 = vmatprep.subr.mxu0 0.0
        %1099 = vmatpush1.msra.mxu0 0.0
        %1100 = vmatprep.subr.mxu0 0.0
        %1101 = vmatpush1.msra.mxu0 0.0
        %1102 = vmatprep.subr.mxu0 0.0
        %1103 = vmatpush1.msra.mxu0 0.0
        %1104 = vmatprep.subr.mxu0 0.0
        %1105 = vmatpush1.msra.mxu0 0.0
        %1106 = vmatprep.subr.mxu0 0.0
        %1107 = vmatpush1.msra.mxu0 0.0
        %1108 = vmatprep.subr.mxu0 0.0
        %1109 = vmatpush1.msra.mxu0 0.0
        %1110 = vmatprep.subr.mxu0 0.0
        %1111 = vmatpush1.msra.mxu0 0.0
        %1112 = vmatprep.subr.mxu0 0.0
        %1113 = vmatpush1.msra.mxu0 0.0
        %1114 = vmatprep.subr.mxu0 0.0
        %1115 = vmatpush1.msra.mxu0 0.0
        %1116 = vmatprep.subr.mxu0 0.0
        %1117 = vmatpush1.msra.mxu0 0.0
        %1118 = vmatprep.subr.mxu0 0.0
        %1119 = vmatpush1.msra.mxu0 0.0
        %1120 = vmatprep.subr.mxu0 0.0
        %1121 = vmatpush1.msra.mxu0 0.0
        %1122 = vmatprep.subr.mxu0 0.0
        %1123 = vmatpush1.msra.mxu0 0.0
        %1124 = vmatprep.subr.mxu0 0.0
        %1125 = vmatpush1.msra.mxu0 0.0
        %1126 = vmatprep.subr.mxu0 0.0
        %1127 = vmatpush1.msra.mxu0 0.0
        %1128 = vmatprep.subr.mxu0 0.0
        %1129 = vmatpush1.msra.mxu0 0.0
        %1130 = vmatprep.subr.mxu0 0.0
        %1131 = vmatpush1.msra.mxu0 0.0
        %1132 = vmatprep.subr.mxu0 0.0
        %1133 = vmatpush1.msra.mxu0 0.0
        %1134 = vmatprep.subr.mxu0 0.0
        %1135 = vmatpush1.msra.mxu0 0.0
        %1136 = vmatprep.subr.mxu0 0.0
        %1137 = vmatpush1.msra.mxu0 0.0
        %1138 = vmatprep.subr.mxu0 0.0
        %1139 = vmatpush1.msra.mxu0 0.0
        %1140 = vmatprep.subr.mxu0 0.0
        %1141 = vmatpush1.msra.mxu0 0.0
        %1142 = vmatprep.subr.mxu0 0.0
        %1143 = vmatpush1.msra.mxu0 0.0
        %1144 = vmatprep.subr.mxu0 0.0
        %1145 = vmatpush1.msra.mxu0 0.0
        %1146 = vmatprep.subr.mxu0 0.0
        %1147 = vmatpush1.msra.mxu0 0.0
        %1148 = vmatprep.subr.mxu0 0.0
        %1149 = vmatpush1.msra.mxu0 0.0
        %1150 = vmatprep.mubr.f32.mxu0 0.0
        %1151 = vmatmul.mubr.f32.gmra.mrb[0].mxu0 %v1084
        %v1152 = vpop.f32.mrb[0].mxu0
        %v1153 = vadd.f32 %v1082, %v1152
        %v1154 = vpop.f32.mrb[0].mxu0
        %1155 = vdwg.mxu0
        %v1156 = vld [vmem:[%s660] sm:$0xf]
        %v1157 = vld [vmem:[%s660 + $0x4] sm:$0xf]
        %v1158 = vld [vmem:[%s660 + $0x8] sm:$0xf]
        %v1159 = vld [vmem:[%s660 + $0xc] sm:$0xf]
        %v1160 = vunpack.c.l.bf16 %v1156
        %v1161 = vunpack.c.l.bf16 %v1157
        %v1162 = vunpack.c.l.bf16 %v1158
        %v1163 = vunpack.c.l.bf16 %v1159
        %v1164 = vld [vmem:[%s667] sm:$0xf]
        %v1165 = vld [vmem:[%s667 + $0x4] sm:$0xf]
        %v1166 = vld [vmem:[%s667 + $0x8] sm:$0xf]
        %v1167 = vld [vmem:[%s667 + $0xc] sm:$0xf]
        %v1168 = vunpack.c.l.bf16 %v1164
        %v1169 = vunpack.c.l.bf16 %v1165
        %v1170 = vunpack.c.l.bf16 %v1166
        %v1171 = vunpack.c.l.bf16 %v1167
        %v1172 = vld [vmem:[%s4] sm:$0xff]
        %v1173 = vld [vmem:[%s4 + $0x8] sm:$0xff]
        %v1174 = vld [vmem:[%s4 + $0x10] sm:$0xff]
        %v1175 = vld [vmem:[%s4 + $0x18] sm:$0xff]
        %1177 = vset.pattern.permute.xlu0 0
        %1178 = vperm.xlu0 %1177, %v1172
        %v1179 = vpop.permute.xlu0 %1178
        %1182 = vset.pattern.permute.xlu0 0
        %1183 = vperm.xlu0 %1182, %v1173
        %v1184 = vpop.permute.xlu0 %1183
        %1187 = vset.pattern.permute.xlu0 0
        %1188 = vperm.xlu0 %1187, %v1174
        %v1189 = vpop.permute.xlu0 %1188
        %1192 = vset.pattern.permute.xlu0 0
        %1193 = vperm.xlu0 %1192, %v1175
        %v1194 = vpop.permute.xlu0 %1193
        %v1196 = vmul.f32 %v1160, %v1179
        %v1197 = vmul.f32 %v1161, %v1184
        %v1198 = vmul.f32 %v1162, %v1189
        %v1199 = vmul.f32 %v1163, %v1194
        %v1200 = vmul.f32 %v1196, %v1168
        %v1201 = vmul.f32 %v1197, %v1169
        %v1202 = vmul.f32 %v1198, %v1170
        %v1203 = vmul.f32 %v1199, %v1171
        %v1204 = vld [vmem:[%s13] sm:$0xff]
        %v1205 = vld [vmem:[%s13 + $0x8] sm:$0xff]
        %v1206 = vld [vmem:[%s13 + $0x10] sm:$0xff]
        %v1207 = vld [vmem:[%s13 + $0x18] sm:$0xff]
        %v1208 = vld [vmem:[%s14] sm:$0xff]
        %v1209 = vld [vmem:[%s14 + $0x8] sm:$0xff]
        %v1210 = vld [vmem:[%s14 + $0x10] sm:$0xff]
        %v1211 = vld [vmem:[%s14 + $0x18] sm:$0xff]
        %1213 = vset.pattern.permute.xlu0 0
        %1214 = vperm.xlu0 %1213, %v1208
        %v1215 = vpop.permute.xlu0 %1214
        %1218 = vset.pattern.permute.xlu0 0
        %1219 = vperm.xlu0 %1218, %v1209
        %v1220 = vpop.permute.xlu0 %1219
        %1223 = vset.pattern.permute.xlu0 0
        %1224 = vperm.xlu0 %1223, %v1210
        %v1225 = vpop.permute.xlu0 %1224
        %1228 = vset.pattern.permute.xlu0 0
        %1229 = vperm.xlu0 %1228, %v1211
        %v1230 = vpop.permute.xlu0 %1229
        %v1232 = vlaneseq
        %v1233 = vshrl.u32 %v1232, 7
        %v1234 = vsub.s32 0, %v1233
        %v1235 = vrot.slane %v1153, %v1234
        %v1236 = vmul.f32 %v1215, %v1235
        %v1237 = vmul.f32 %v1220, %v1235
        %v1238 = vmul.f32 %v1225, %v1235
        %v1239 = vmul.f32 %v1230, %v1235
        %v1241 = vsel %vm988, %v1204, 0
        %v1244 = vsel %vm988, %v1205, 0
        %v1247 = vsel %vm988, %v1206, 0
        %v1250 = vsel %vm988, %v1207, 0
        %1252 = vmatprep.subr.mxu0 0.0
        %1253 = vmatpush1.msra.mxu0 %v1200
        %1254 = vmatprep.subr.mxu0 0.0
        %1255 = vmatpush1.msra.mxu0 %v1201
        %1256 = vmatprep.subr.mxu0 0.0
        %1257 = vmatpush1.msra.mxu0 %v1202
        %1258 = vmatprep.subr.mxu0 0.0
        %1259 = vmatpush1.msra.mxu0 %v1203
        %1260 = vmatprep.subr.mxu0 0.0
        %1261 = vmatpush1.msra.mxu0 0.0
        %1262 = vmatprep.subr.mxu0 0.0
        %1263 = vmatpush1.msra.mxu0 0.0
        %1264 = vmatprep.subr.mxu0 0.0
        %1265 = vmatpush1.msra.mxu0 0.0
        %1266 = vmatprep.subr.mxu0 0.0
        %1267 = vmatpush1.msra.mxu0 0.0
        %1268 = vmatprep.subr.mxu0 0.0
        %1269 = vmatpush1.msra.mxu0 0.0
        %1270 = vmatprep.subr.mxu0 0.0
        %1271 = vmatpush1.msra.mxu0 0.0
        %1272 = vmatprep.subr.mxu0 0.0
        %1273 = vmatpush1.msra.mxu0 0.0
        %1274 = vmatprep.subr.mxu0 0.0
        %1275 = vmatpush1.msra.mxu0 0.0
        %1276 = vmatprep.subr.mxu0 0.0
        %1277 = vmatpush1.msra.mxu0 0.0
        %1278 = vmatprep.subr.mxu0 0.0
        %1279 = vmatpush1.msra.mxu0 0.0
        %1280 = vmatprep.subr.mxu0 0.0
        %1281 = vmatpush1.msra.mxu0 0.0
        %1282 = vmatprep.subr.mxu0 0.0
        %1283 = vmatpush1.msra.mxu0 0.0
        %1284 = vmatprep.subr.mxu0 0.0
        %1285 = vmatpush1.msra.mxu0 0.0
        %1286 = vmatprep.subr.mxu0 0.0
        %1287 = vmatpush1.msra.mxu0 0.0
        %1288 = vmatprep.subr.mxu0 0.0
        %1289 = vmatpush1.msra.mxu0 0.0
        %1290 = vmatprep.subr.mxu0 0.0
        %1291 = vmatpush1.msra.mxu0 0.0
        %1292 = vmatprep.subr.mxu0 0.0
        %1293 = vmatpush1.msra.mxu0 0.0
        %1294 = vmatprep.subr.mxu0 0.0
        %1295 = vmatpush1.msra.mxu0 0.0
        %1296 = vmatprep.subr.mxu0 0.0
        %1297 = vmatpush1.msra.mxu0 0.0
        %1298 = vmatprep.subr.mxu0 0.0
        %1299 = vmatpush1.msra.mxu0 0.0
        %1300 = vmatprep.subr.mxu0 0.0
        %1301 = vmatpush1.msra.mxu0 0.0
        %1302 = vmatprep.subr.mxu0 0.0
        %1303 = vmatpush1.msra.mxu0 0.0
        %1304 = vmatprep.subr.mxu0 0.0
        %1305 = vmatpush1.msra.mxu0 0.0
        %1306 = vmatprep.subr.mxu0 0.0
        %1307 = vmatpush1.msra.mxu0 0.0
        %1308 = vmatprep.subr.mxu0 0.0
        %1309 = vmatpush1.msra.mxu0 0.0
        %1310 = vmatprep.subr.mxu0 0.0
        %1311 = vmatpush1.msra.mxu0 0.0
        %1312 = vmatprep.subr.mxu0 0.0
        %1313 = vmatpush1.msra.mxu0 0.0
        %1314 = vmatprep.subr.mxu0 0.0
        %1315 = vmatpush1.msra.mxu0 0.0
        %1316 = vmatprep.mubr.f32.mxu0 0.0
        %1317 = vmatmul.mubr.f32.gmra.mrb[0].mxu0 %v1241
        %v1318 = vpop.f32.mrb[0].mxu0
        %v1319 = vadd.f32 %v1236, %v1318
        %v1320 = vpop.f32.mrb[0].mxu0
        %1321 = vmatprep.mubr.f32.mxu0 0.0
        %1322 = vmatmul.mubr.f32.gmra.mrb[0].mxu0 %v1244
        %v1323 = vpop.f32.mrb[0].mxu0
        %v1324 = vadd.f32 %v1237, %v1323
        %v1325 = vpop.f32.mrb[0].mxu0
        %1326 = vmatprep.mubr.f32.mxu0 0.0
        %1327 = vmatmul.mubr.f32.gmra.mrb[0].mxu0 %v1247
        %v1328 = vpop.f32.mrb[0].mxu0
        %v1329 = vadd.f32 %v1238, %v1328
        %v1330 = vpop.f32.mrb[0].mxu0
        %1331 = vmatprep.mubr.f32.mxu0 0.0
        %1332 = vmatmul.mubr.f32.gmra.mrb[0].mxu0 %v1250
        %v1333 = vpop.f32.mrb[0].mxu0
        %v1334 = vadd.f32 %v1239, %v1333
        %v1335 = vpop.f32.mrb[0].mxu0
        %1336 = vdwg.mxu0
        %v1337 = vld [vmem:[%s15] sm:$0xff]
        %v1338 = vld [vmem:[%s15 + $0x8] sm:$0xff]
        %v1339 = vld [vmem:[%s15 + $0x10] sm:$0xff]
        %v1340 = vld [vmem:[%s15 + $0x18] sm:$0xff]
        %1342 = vset.pattern.permute.xlu0 0
        %1343 = vperm.xlu0 %1342, %v1337
        %v1344 = vpop.permute.xlu0 %1343
        %1347 = vset.pattern.permute.xlu0 0
        %1348 = vperm.xlu0 %1347, %v1338
        %v1349 = vpop.permute.xlu0 %1348
        %1352 = vset.pattern.permute.xlu0 0
        %1353 = vperm.xlu0 %1352, %v1339
        %v1354 = vpop.permute.xlu0 %1353
        %1357 = vset.pattern.permute.xlu0 0
        %1358 = vperm.xlu0 %1357, %v1340
        %v1359 = vpop.permute.xlu0 %1358
        %v1361 = vadd.f32 %v1319, %v1344
        %v1362 = vadd.f32 %v1324, %v1349
        %v1363 = vadd.f32 %v1329, %v1354
        %v1364 = vadd.f32 %v1334, %v1359
        %v1365 = vmax.f32 %v1361, 0.0
        %v1366 = vmax.f32 %v1362, 0.0
        %v1367 = vmax.f32 %v1363, 0.0
        %v1368 = vmax.f32 %v1364, 0.0
        %v1369 = vld [vmem:[%s16] sm:$0x1]
        %v1370 = vld [vmem:[#allocation3] sm:$0x1]
        %1372 = vset.pattern.permute.xlu0 0
        %1373 = vperm.xlu0 %1372, %v1370
        %v1374 = vpop.permute.xlu0 %1373
        %v1376 = vlaneseq
        %v1377 = vshrl.u32 %v1376, 7
        %v1378 = vsub.s32 0, %v1377
        %v1379 = vrot.slane %v1374, %v1378
        %v1381 = vsel %vm988, %v1369, 0
        %1383 = vmatprep.subr.mxu0 0.0
        %1384 = vmatpush1.msra.mxu0 %v1365
        %1385 = vmatprep.subr.mxu0 0.0
        %1386 = vmatpush1.msra.mxu0 %v1366
        %1387 = vmatprep.subr.mxu0 0.0
        %1388 = vmatpush1.msra.mxu0 %v1367
        %1389 = vmatprep.subr.mxu0 0.0
        %1390 = vmatpush1.msra.mxu0 %v1368
        %1391 = vmatprep.subr.mxu0 0.0
        %1392 = vmatpush1.msra.mxu0 0.0
        %1393 = vmatprep.subr.mxu0 0.0
        %1394 = vmatpush1.msra.mxu0 0.0
        %1395 = vmatprep.subr.mxu0 0.0
        %1396 = vmatpush1.msra.mxu0 0.0
        %1397 = vmatprep.subr.mxu0 0.0
        %1398 = vmatpush1.msra.mxu0 0.0
        %1399 = vmatprep.subr.mxu0 0.0
        %1400 = vmatpush1.msra.mxu0 0.0
        %1401 = vmatprep.subr.mxu0 0.0
        %1402 = vmatpush1.msra.mxu0 0.0
        %1403 = vmatprep.subr.mxu0 0.0
        %1404 = vmatpush1.msra.mxu0 0.0
        %1405 = vmatprep.subr.mxu0 0.0
        %1406 = vmatpush1.msra.mxu0 0.0
        %1407 = vmatprep.subr.mxu0 0.0
        %1408 = vmatpush1.msra.mxu0 0.0
        %1409 = vmatprep.subr.mxu0 0.0
        %1410 = vmatpush1.msra.mxu0 0.0
        %1411 = vmatprep.subr.mxu0 0.0
        %1412 = vmatpush1.msra.mxu0 0.0
        %1413 = vmatprep.subr.mxu0 0.0
        %1414 = vmatpush1.msra.mxu0 0.0
        %1415 = vmatprep.subr.mxu0 0.0
        %1416 = vmatpush1.msra.mxu0 0.0
        %1417 = vmatprep.subr.mxu0 0.0
        %1418 = vmatpush1.msra.mxu0 0.0
        %1419 = vmatprep.subr.mxu0 0.0
        %1420 = vmatpush1.msra.mxu0 0.0
        %1421 = vmatprep.subr.mxu0 0.0
        %1422 = vmatpush1.msra.mxu0 0.0
        %1423 = vmatprep.subr.mxu0 0.0
        %1424 = vmatpush1.msra.mxu0 0.0
        %1425 = vmatprep.subr.mxu0 0.0
        %1426 = vmatpush1.msra.mxu0 0.0
        %1427 = vmatprep.subr.mxu0 0.0
        %1428 = vmatpush1.msra.mxu0 0.0
        %1429 = vmatprep.subr.mxu0 0.0
        %1430 = vmatpush1.msra.mxu0 0.0
        %1431 = vmatprep.subr.mxu0 0.0
        %1432 = vmatpush1.msra.mxu0 0.0
        %1433 = vmatprep.subr.mxu0 0.0
        %1434 = vmatpush1.msra.mxu0 0.0
        %1435 = vmatprep.subr.mxu0 0.0
        %1436 = vmatpush1.msra.mxu0 0.0
        %1437 = vmatprep.subr.mxu0 0.0
        %1438 = vmatpush1.msra.mxu0 0.0
        %1439 = vmatprep.subr.mxu0 0.0
        %1440 = vmatpush1.msra.mxu0 0.0
        %1441 = vmatprep.subr.mxu0 0.0
        %1442 = vmatpush1.msra.mxu0 0.0
        %1443 = vmatprep.subr.mxu0 0.0
        %1444 = vmatpush1.msra.mxu0 0.0
        %1445 = vmatprep.subr.mxu0 0.0
        %1446 = vmatpush1.msra.mxu0 0.0
        %1447 = vmatprep.mubr.f32.mxu0 0.0
        %1448 = vmatmul.mubr.f32.gmra.mrb[0].mxu0 %v1381
        %v1449 = vpop.f32.mrb[0].mxu0
        %v1450 = vadd.f32 %v1379, %v1449
        %v1451 = vpop.f32.mrb[0].mxu0
        %1452 = vdwg.mxu0
        %1453 = vst [vmem:[%s728] sm:$0x1] %v1450
        %s1454 = sand.u32 %s442, 1
        %s1455 = scalar_lea.sflag [#allocation7], %s1454
        %s1456 = sand.u32 %s442, 1
        %s1457 = scalar_lea.vmem [#allocation6], %s1456
        // Predicated region
        $region175: #{tpu_custom_call.1} parent=165 // pred_check
          %p1458 = pneg %p452
        $region176: #{tpu_custom_call.1} parent=165 // pred_check_branch
          %1460 = sbr.rel (%p1458) target = $region178
        $region177: #{tpu_custom_call.1} parent=165 // pred_region
          %s1462 = ssub.s32 16, 16
          %1463 = vsyncadd %s1455, %s1462
          %s1464 = smul.addr %s36, 16
          %s1465 = scalar_lea.hbm %s18, %s1464
          %s1467 = sshll.u32 %s1457, 4
          %s1468 = int_to_ptr.vmem [resolvable:$true] %s1467
          %1470 = dma.vmem_to_hbm [thread:$0]  %s1468, 16, %s1465, %s1455
        $region178: #{tpu_custom_call.1} parent=165 // pred_fallthru
          _
      $region166: #{tpu_custom_call.1} parent=5 // pred_fallthru
        _
      %p1471 = scmp.le.s32.totalorder 2, %s31
      // Predicated region
      $region179: #{tpu_custom_call.1} parent=5 // pred_check
        %p1472 = pneg %p1471
      $region180: #{tpu_custom_call.1} parent=5 // pred_check_branch
        %1474 = sbr.rel (%p1472) target = $region182
      $region181: #{tpu_custom_call.1} parent=5 // pred_region
        %s1475 = ssub.s32 %s31, 2
        // Predicated region
        $region183: #{tpu_custom_call.1} parent=181 // pred_check
          %p1476 = pneg %p458
        $region184: #{tpu_custom_call.1} parent=181 // pred_check_branch
          %1478 = sbr.rel (%p1476) target = $region186
        $region185: #{tpu_custom_call.1} parent=181 // pred_region
          %s1479 = sand.u32 %s443, 1
          %s1480 = scalar_lea.sflag [#allocation7], %s1479
          %s1481 = sand.u32 %s443, 1
          %s1482 = scalar_lea.vmem [#allocation6], %s1481
          %1483 = dma.done %s1480, 16
        $region186: #{tpu_custom_call.1} parent=181 // pred_fallthru
          _
      $region182: #{tpu_custom_call.1} parent=5 // pred_fallthru
        _
    $region6: #{tpu_custom_call.1} parent=1 // loop_footer
      %s35 = sadd.s32 1, %s31
    $region7: #{tpu_custom_call.1} parent=1 // loop_footer_branch
      %30 = sbr.rel target = $region3
    $region8: #{tpu_custom_call.1} parent=1 // loop_exit
      _
    %1484 = vsyncpa [#allocation7], 1
    %s1485 = scalar_lea.sflag [#allocation7], 1
    %1486 = vsyncpa %s1485, 1

</llo_original>
